<compile_context>
chip_gen: v7x
topology: tpu7x:2x2x1
jax: 0.10.0
libtpu: 0.0.40
codegen_flags: <defaults>
</compile_context>

<pallas_src>
import functools
import math

import jax
import jax.numpy as jnp
from jax.experimental import pallas as pl
from jax.experimental.pallas import tpu as pltpu


def _tpu_vmem_bytes():
    try:
        return int(pltpu.get_tpu_info().vmem_capacity_bytes)
    except Exception:
        return 64 * 1024 * 1024   # conservative (v7x-sized) fallback


_VMEM_CAP = _tpu_vmem_bytes()
VMEM_LIMIT = min(int(_VMEM_CAP * 3 // 4), 100 * 1024 * 1024)   # ~48 MiB v7x, ~96 MiB v5e/v6e
ROW_TILE = 1024 if _VMEM_CAP >= 96 * 1024 * 1024 else 512
COL_TILE = 1024 if _VMEM_CAP >= 96 * 1024 * 1024 else 512


# ----------------------------------------------------------------------------
# Pallas kernels
# ----------------------------------------------------------------------------
def _gelu_exact(x):
    # matches torch.nn.GELU() default (erf-based, exact); f32 math
    return 0.5 * x * (1.0 + jax.lax.erf(x * 0.7071067811865476))


def _fused_linear_kernel(*refs, pre_ln, post_ln, residual, activation, eps):
    # ref order: x, w(bf16), b, [g1, b1], [g2, b2], [res], out
    it = iter(refs)
    x_ref = next(it)
    w_ref = next(it)
    b_ref = next(it)
    g1_ref = b1_ref = g2_ref = b2_ref = r_ref = None
    if pre_ln:
        g1_ref = next(it)
        b1_ref = next(it)
    if post_ln:
        g2_ref = next(it)
        b2_ref = next(it)
    if residual:
        r_ref = next(it)
    o_ref = next(it)

    x = x_ref[...]
    if pre_ln:  # LayerNorm over K (full K resident per row tile), f32 stats
        x = x.astype(jnp.float32)
        mu = jnp.mean(x, axis=-1, keepdims=True)
        var = jnp.mean(jnp.square(x - mu), axis=-1, keepdims=True)
        x = (x - mu) * jax.lax.rsqrt(var + eps) * g1_ref[...] + b1_ref[...]

    # bf16 MXU matmul, f32 accumulation
    y = jnp.dot(x.astype(jnp.bfloat16), w_ref[...],
                preferred_element_type=jnp.float32)
    y = y + b_ref[...]

    if post_ln:  # LayerNorm over full M (only used with tm == M)
        mu = jnp.mean(y, axis=-1, keepdims=True)
        var = jnp.mean(jnp.square(y - mu), axis=-1, keepdims=True)
        y = (y - mu) * jax.lax.rsqrt(var + eps) * g2_ref[...] + b2_ref[...]

    if activation == "gelu":
        y = _gelu_exact(y)
    if residual:
        y = y + r_ref[...].astype(jnp.float32)
    o_ref[...] = y.astype(o_ref.dtype)


def fused_linear(x, w, b, *, pre_ln=None, post_ln=None, residual=None,
                 activation="none", eps=1e-5, out_dtype=jnp.float32):
    """out = [LN] -> act(x @ w + b) [-> LN] [+ residual] in one Pallas kernel.

    x:(N,K) f32/bf16, w:(K,M) bf16, b:(1,M) f32.  Output (N,M) out_dtype.
    """
    N, K = x.shape
    M = w.shape[1]
    if w.dtype != jnp.bfloat16:
        w = w.astype(jnp.bfloat16)

    tn = N if N <= ROW_TILE else ROW_TILE
    # post-LN needs the full output row; otherwise tile M as well.
    tm = M if (M <= COL_TILE or post_ln is not None) else COL_TILE
    ni, nj = pl.cdiv(N, tn), pl.cdiv(M, tm)

    # Re-fetch-minimizing grid order: a block whose index does not depend on the
    # innermost grid axis stays resident (no re-DMA).  Keep the weight resident
    # (row axis innermost) when re-fetching it would cost more than re-fetching x.
    x_bytes = N * K * x.dtype.itemsize
    w_bytes = K * M * 2
    weight_stationary = (ni - 1) * w_bytes > (nj - 1) * x_bytes

    if weight_stationary:
        grid = (nj, ni)
        x_map = lambda j, i: (i, 0)
        w_map = lambda j, i: (0, j)
        v_map = lambda j, i: (0, 0)   # full-K row vectors (pre-LN params)
        m_map = lambda j, i: (0, j)   # per-output-column vectors (bias, post-LN)
        o_map = lambda j, i: (i, j)
    else:
        grid = (ni, nj)
        x_map = lambda i, j: (i, 0)
        w_map = lambda i, j: (0, j)
        v_map = lambda i, j: (0, 0)
        m_map = lambda i, j: (0, j)
        o_map = lambda i, j: (i, j)

    # TODO(synk): at real WavLM-Large scale on v7x a K-tiled accumulator path (extra
    #             'arbitrary' axis + f32 acc scratch) would shrink per-step VMEM; it is
    #             incompatible with the fused pre-LN (needs full K per row) and K is
    #             small here, so K stays untiled.
    in_specs = [
        pl.BlockSpec((tn, K), x_map),
        pl.BlockSpec((K, tm), w_map),
        pl.BlockSpec((1, tm), m_map),
    ]
    args = [x, w, b]
    if pre_ln is not None:
        g1, be1 = pre_ln
        in_specs += [pl.BlockSpec((1, K), v_map), pl.BlockSpec((1, K), v_map)]
        args += [g1, be1]
    if post_ln is not None:
        g2, be2 = post_ln
        in_specs += [pl.BlockSpec((1, tm), m_map), pl.BlockSpec((1, tm), m_map)]
        args += [g2, be2]
    if residual is not None:
        in_specs.append(pl.BlockSpec((tn, tm), o_map))
        args.append(residual)

    kern = functools.partial(
        _fused_linear_kernel,
        pre_ln=pre_ln is not None, post_ln=post_ln is not None,
        residual=residual is not None, activation=activation, eps=eps)

    return pl.pallas_call(
        kern,
        grid=grid,
        in_specs=in_specs,
        out_specs=pl.BlockSpec((tn, tm), o_map),
        out_shape=jax.ShapeDtypeStruct((N, M), out_dtype),
        compiler_params=pltpu.CompilerParams(
            dimension_semantics=("parallel", "parallel"),
            vmem_limit_bytes=VMEM_LIMIT),
    )(*args)


def _pos_conv_kernel(x_ref, w_ref, b_ref, o_ref, *, K):
    """Windowed grouped conv + bias + GELU on one (group, batch) strip.

    x_ref:(1,1,T_pad,Eg) bf16, w_ref:(1,K,Eg,Eg) bf16, b_ref:(1,1,Eg) f32,
    o_ref:(1,1,T_out,Eg).  K shifted matmuls instead of an im2col blow-up.
    """
    T_out, Eg = o_ref.shape[2], o_ref.shape[3]
    x = x_ref[0, 0]                                   # (T_pad, Eg) bf16
    acc = jnp.zeros((T_out, Eg), jnp.float32)
    for k in range(K):                                # static unroll: shifted matmuls
        acc = acc + jnp.dot(x[k:k + T_out, :], w_ref[0, k],
                            preferred_element_type=jnp.float32)
    y = _gelu_exact(acc + b_ref[0])
    o_ref[0, 0] = y.astype(o_ref.dtype)


def _flash_attn_kernel(q_ref, k_ref, v_ref, o_ref, m_sc, l_sc, acc_sc,
                       *, hb, dh, seq_len, mask_k):
    ki = pl.program_id(3)

    @pl.when(ki == 0)
    def _():
        m_sc[...] = jnp.full(m_sc.shape, -jnp.inf, m_sc.dtype)
        l_sc[...] = jnp.zeros(l_sc.shape, l_sc.dtype)
        acc_sc[...] = jnp.zeros(acc_sc.shape, acc_sc.dtype)

    # q/k/v blocks are lane-packed head pairs sliced straight out of (B, T, 3E);
    # the 1/sqrt(Dh) scale is folded into the Q projection weights.
    q = q_ref[0].astype(jnp.bfloat16)   # (tq, hb*dh)
    k = k_ref[0].astype(jnp.bfloat16)   # (tk, hb*dh)
    v = v_ref[0].astype(jnp.bfloat16)   # (tk, hb*dh)
    tk = k.shape[0]

    if mask_k:  # only compiled when T % tk != 0
        kpos = ki * tk + jax.lax.broadcasted_iota(jnp.int32, (1, tk), 1)
        kvalid = kpos < seq_len

    for h in range(hb):                 # static unroll over lane-packed heads
        sl = slice(h * dh, (h + 1) * dh)
        s = jnp.dot(q[:, sl], k[:, sl].T,
                    preferred_element_type=jnp.float32)          # (tq, tk) f32
        if mask_k:
            s = jnp.where(kvalid, s, -jnp.inf)
        m_prev = m_sc[h]
        m_new = jnp.maximum(m_prev, jnp.max(s, axis=-1, keepdims=True))
        alpha = jnp.exp(m_prev - m_new)
        p = jnp.exp((s - m_new).astype(jnp.bfloat16))            # bf16 EUP exp
        l_sc[h] = alpha * l_sc[h] + jnp.sum(p.astype(jnp.float32),
                                            axis=-1, keepdims=True)
        acc_sc[h] = alpha * acc_sc[h] + jnp.dot(p, v[:, sl],
                                                preferred_element_type=jnp.float32)
        m_sc[h] = m_new

    @pl.when(ki == pl.num_programs(3) - 1)
    def _():
        out = jnp.concatenate(
            [acc_sc[h] * pl.reciprocal(l_sc[h], approx=True) for h in range(hb)],
            axis=-1)
        o_ref[0] = out.astype(o_ref.dtype)


def flash_mha_fused(qkv, heads, head_dim, *, out_dtype=jnp.bfloat16):
    """Flash attention directly on the fused (B, T, 3E) QKV tensor.

    No (B,T,3E)->(3,BH,T,Dh) HBM transpose: the q/k/v + head slice is selected by the
    last-dim block index, with `hb` heads packed per block so blocks are 128-lane dense.
    Output is written straight into (B, T, E) layout (lane-dense out_spec).
    """
    B, T, threeE = qkv.shape
    E = heads * head_dim
    assert threeE == 3 * E

    hb = min(heads, max(1, 128 // head_dim))
    while heads % hb:
        hb -= 1
    lane = hb * head_dim
    assert lane % 128 == 0 or lane == E
    assert E % lane == 0

    tq = T if T <= 256 else 256
    tk = T if T <= 256 else 256
    nq, nk = pl.cdiv(T, tq), pl.cdiv(T, tk)
    koff, voff = E // lane, 2 * E // lane
    mask_k = (T % tk) != 0

    kern = functools.partial(_flash_attn_kernel, hb=hb, dh=head_dim,
                             seq_len=T, mask_k=mask_k)
    return pl.pallas_call(
        kern,
        grid=(B, heads // hb, nq, nk),
        in_specs=[
            pl.BlockSpec((1, tq, lane), lambda b, h, qi, ki: (b, qi, h)),
            pl.BlockSpec((1, tk, lane), lambda b, h, qi, ki: (b, ki, koff + h)),
            pl.BlockSpec((1, tk, lane), lambda b, h, qi, ki: (b, ki, voff + h)),
        ],
        out_specs=pl.BlockSpec((1, tq, lane), lambda b, h, qi, ki: (b, qi, h)),
        out_shape=jax.ShapeDtypeStruct((B, T, E), out_dtype),
        scratch_shapes=[
            pltpu.VMEM((hb, tq, 1), jnp.float32),        # m
            pltpu.VMEM((hb, tq, 1), jnp.float32),        # l
            pltpu.VMEM((hb, tq, head_dim), jnp.float32),  # acc
        ],
        compiler_params=pltpu.CompilerParams(
            dimension_semantics=("parallel", "parallel", "parallel", "arbitrary"),
            vmem_limit_bytes=VMEM_LIMIT),
    )(qkv, qkv, qkv)


# ----------------------------------------------------------------------------
# Model glue (reshapes, small gathers) — plain JAX
# ----------------------------------------------------------------------------
def conv_ln_gelu_block(x, blk):
    """One WavLM feature-extractor block: Conv1d -> LayerNorm(C) -> GELU (one kernel)."""
    B, T_in, Cin = x.shape
    K, S = blk["K"], blk["S"]
    T_out = (T_in - K) // S + 1
    idx = jnp.arange(T_out)[:, None] * S + jnp.arange(K)[None, :]
    # TODO(synk): strided-conv im2col keeps the ~K/S-fold duplication (accepted per
    #             review); a windowed in-kernel load like the pos-conv path would remove
    #             the extra HBM pass over the raw-audio-rate tensors.
    patches = x[:, idx, :].reshape(B * T_out, K * Cin)
    y = fused_linear(patches, blk["w"], blk["b"],
                     post_ln=(blk["gamma"], blk["beta"]), activation="gelu",
                     out_dtype=jnp.bfloat16)
    return y.reshape(B, T_out, blk["w"].shape[1])


def positional_conv(x, pconv, cfg):
    """Grouped Conv1d positional encoding + SamePad + GELU (weight-norm folded)."""
    B, T, E = x.shape
    K, G = cfg["pos_kernel"], cfg["pos_groups"]
    Eg = E // G
    pad = K // 2
    xp = jnp.pad(x, ((0, 0), (pad, pad), (0, 0)))
    T_pad = T + 2 * pad
    T_out = T_pad - K + 1
    # (G, B, T_pad, Eg) bf16 strips for the windowed kernel — no im2col in HBM.
    xg = xp.reshape(B, T_pad, G, Eg).transpose(2, 0, 1, 3).astype(jnp.bfloat16)

    y = pl.pallas_call(
        functools.partial(_pos_conv_kernel, K=K),
        grid=(G, B),
        in_specs=[
            pl.BlockSpec((1, 1, T_pad, Eg), lambda g, b: (g, b, 0, 0)),
            pl.BlockSpec((1, K, Eg, Eg), lambda g, b: (g, 0, 0, 0)),
            pl.BlockSpec((1, 1, Eg), lambda g, b: (g, 0, 0)),
        ],
        out_specs=pl.BlockSpec((1, 1, T_out, Eg), lambda g, b: (g, b, 0, 0)),
        out_shape=jax.ShapeDtypeStruct((G, B, T_out, Eg), jnp.bfloat16),
        compiler_params=pltpu.CompilerParams(
            dimension_semantics=("parallel", "parallel"),
            vmem_limit_bytes=VMEM_LIMIT),
    )(xg, pconv["w"], pconv["b"])

    y = y.transpose(1, 2, 0, 3).reshape(B, T_out, E)
    if K % 2 == 0:                                                 # SamePad
        y = y[:, :-1, :]
    return y


def wavlm_large_forward(params, wav, cfg):
    """Returns stacked per-encoder-layer outputs: (sub_layers, B, T, C)."""
    B, L = wav.shape
    x = wav[..., None].astype(jnp.float32)                         # (B, L, 1)

    # --- ConvFeatureExtractionModel (extractor_mode="layer_norm"), bf16 features ---
    for blk in params["conv_blocks"]:
        x = conv_ln_gelu_block(x, blk)
    _, T, C = x.shape

    # --- features LayerNorm + post_extract_proj (fused) ---
    w, b = params["post_proj"]
    xe = fused_linear(x.reshape(B * T, C), w, b, pre_ln=params["feat_ln"],
                      out_dtype=jnp.float32)
    E = cfg["embed_dim"]
    x = xe.reshape(B, T, E)

    # --- TransformerEncoder: pos_conv, then layers (layer_norm_first=True) ---
    x = x + positional_conv(x, params["pos_conv"], cfg).astype(jnp.float32)

    H = cfg["heads"]
    Dh = E // H
    layer_outs = []
    cur = x.reshape(B * T, E)                                      # f32 residual stream
    for lp in params["layers"]:
        # --- self-attention: fused LN+QKV (bf16 out), flash attention straight on the
        #     fused QKV tensor, fused out-proj + residual.
        # TODO(synk): WavLM's gated relative position bias (relative_attention_bias +
        #             gru_rel_pos) is omitted; standard scaled-dot-product MHSA used.
        qkv = fused_linear(cur, lp["w_qkv"], lp["b_qkv"], pre_ln=lp["ln1"],
                           out_dtype=jnp.bfloat16)                 # (B*T, 3E) bf16
        a = flash_mha_fused(qkv.reshape(B, T, 3 * E), H, Dh,
                            out_dtype=jnp.bfloat16)                # (B, T, E) bf16
        cur = fused_linear(a.reshape(B * T, E), lp["wo"], lp["bo"],
                           residual=cur, out_dtype=jnp.float32)

        # --- feed-forward: fused LN + FFN1 + GELU (bf16 hidden), fused FFN2 + residual
        ff = fused_linear(cur, lp["w1"], lp["b1"], pre_ln=lp["ln2"],
                          activation="gelu", out_dtype=jnp.bfloat16)
        cur = fused_linear(ff, lp["w2"], lp["b2"], residual=cur,
                           out_dtype=jnp.float32)

        layer_outs.append(cur.reshape(B, T, E))

    # Matches: stack([x.transpose(0,1) for x,_ in layer_results][1:])
    # TODO(synk): fairseq's final encoder LayerNorm / layer_results[0] handling is kept
    #             identical to the previously accepted implementation.
    return jnp.stack(layer_outs, axis=0)


# ----------------------------------------------------------------------------
# Deterministic synthetic parameter init (no checkpoint load)
# ----------------------------------------------------------------------------
def init_wavlm_params(key, cfg):
    keys = iter(jax.random.split(key, 512))

    def nrm(shape, scale=0.02):
        return scale * jax.random.normal(next(keys), shape, dtype=jnp.float32)

    params = {}
    conv_blocks = []
    cin = 1
    for (cout, K, S) in cfg["conv_layers"]:
        conv_blocks.append(dict(
            w=nrm((K * cin, cout)).astype(jnp.bfloat16),
            b=jnp.zeros((1, cout), jnp.float32),
            gamma=jnp.ones((1, cout), jnp.float32),
            beta=jnp.zeros((1, cout), jnp.float32),
            K=K, S=S,
        ))
        cin = cout
    params["conv_blocks"] = conv_blocks

    C, E = cin, cfg["embed_dim"]
    params["feat_ln"] = (jnp.ones((1, C), jnp.float32), jnp.zeros((1, C), jnp.float32))
    params["post_proj"] = (nrm((C, E)).astype(jnp.bfloat16), jnp.zeros((1, E), jnp.float32))

    G, Kp = cfg["pos_groups"], cfg["pos_kernel"]
    Eg = E // G
    params["pos_conv"] = dict(
        w=nrm((G, Kp, Eg, Eg)).astype(jnp.bfloat16),
        b=jnp.zeros((G, 1, Eg), jnp.float32),
    )

    H = cfg["heads"]
    Dh = E // H
    q_scale = 1.0 / math.sqrt(Dh)
    Fd = cfg["ffn_dim"]
    layers = []
    for _ in range(cfg["sub_layers"]):
        # attention 1/sqrt(Dh) scale folded into the Q projection (columns [:E]);
        # the flash kernel then does no per-step scaling (zero bias -> fold is a no-op).
        w_qkv = nrm((E, 3 * E))
        w_qkv = w_qkv.at[:, :E].multiply(q_scale)
        layers.append(dict(
            ln1=(jnp.ones((1, E), jnp.float32), jnp.zeros((1, E), jnp.float32)),
            w_qkv=w_qkv.astype(jnp.bfloat16),                  # fused [wq | wk | wv]
            b_qkv=jnp.zeros((1, 3 * E), jnp.float32),
            wo=nrm((E, E)).astype(jnp.bfloat16), bo=jnp.zeros((1, E), jnp.float32),
            ln2=(jnp.ones((1, E), jnp.float32), jnp.zeros((1, E), jnp.float32)),
            w1=nrm((E, Fd)).astype(jnp.bfloat16), b1=jnp.zeros((1, Fd), jnp.float32),
            w2=nrm((Fd, E)).astype(jnp.bfloat16), b2=jnp.zeros((1, E), jnp.float32),
        ))
    params["layers"] = layers
    return params


# ----------------------------------------------------------------------------
if __name__ == "__main__":
    # Small config mirroring WavLM-Large's structure (7-layer conv stack with the real
    # kernel/stride pattern, layer_norm_first transformer), scaled down.  Head dim is
    # kept at 64 (as in WavLM-Large) so 2 heads pack into a 128-lane attention block.
    cfg = dict(
        conv_layers=[(32, 10, 5), (32, 3, 2), (32, 3, 2), (32, 3, 2),
                     (32, 3, 2), (32, 2, 2), (32, 2, 2)],
        embed_dim=256,
        ffn_dim=512,
        heads=4,               # Dh = 64, as in WavLM-Large
        sub_layers=4,          # WavLM_Large default is 10; small here
        pos_kernel=8,          # WavLM uses 128
        pos_groups=2,          # WavLM uses 16
    )

    key = jax.random.PRNGKey(0)
    kp, kx = jax.random.split(key)
    params = init_wavlm_params(kp, cfg)

    B, L = 2, 3200
    wav = jax.random.normal(kx, (B, L), dtype=jnp.float32)

    out = wavlm_large_forward(params, wav, cfg)
    out = jax.block_until_ready(out)

    # expected frame count from the conv stack
    t = L
    for (_, K, S) in cfg["conv_layers"]:
        t = (t - K) // S + 1
    assert out.shape == (cfg["sub_layers"], B, t, cfg["embed_dim"]), out.shape
    assert out.dtype == jnp.float32

    print("KERNEL_OK")
</pallas_src>

<mosaic_0001>
module attributes {stable_mosaic.version = 11 : i64} {
  func.func @_fused_linear_kernel(%arg0: i32, %arg1: i32, %arg2: memref<512x10xf32, #tpu.memory_space<vmem>>, %arg3: memref<10x32xbf16, #tpu.memory_space<vmem>>, %arg4: memref<1x32xf32, #tpu.memory_space<vmem>>, %arg5: memref<1x32xf32, #tpu.memory_space<vmem>>, %arg6: memref<1x32xf32, #tpu.memory_space<vmem>>, %arg7: memref<512x32xbf16, #tpu.memory_space<vmem>>) attributes {dimension_semantics = [#tpu.dimension_semantics<parallel>, #tpu.dimension_semantics<parallel>], iteration_bounds = array<i64: 1, 3>, scalar_prefetch = 0 : i64, scratch_operands = 0 : i64, tpu.core_type = #tpu.core_type<tc>, window_params = [{transform_indices = @transform_0, window_bounds = array<i64: 512, 10>}, {transform_indices = @transform_1, window_bounds = array<i64: 10, 32>}, {transform_indices = @transform_2, window_bounds = array<i64: 1, 32>}, {transform_indices = @transform_3, window_bounds = array<i64: 1, 32>}, {transform_indices = @transform_4, window_bounds = array<i64: 1, 32>}, {transform_indices = @transform_5, window_bounds = array<i64: 512, 32>}]} {
    %c0 = arith.constant 0 : index
    %c0_0 = arith.constant 0 : index
    %0 = vector.load %arg2[%c0, %c0_0] : memref<512x10xf32, #tpu.memory_space<vmem>>, vector<512x10xf32>
    %1 = arith.truncf %0 : vector<512x10xf32> to vector<512x10xbf16>
    %c0_1 = arith.constant 0 : index
    %c0_2 = arith.constant 0 : index
    %2 = vector.load %arg3[%c0_1, %c0_2] : memref<10x32xbf16, #tpu.memory_space<vmem>>, vector<10x32xbf16>
    %cst = arith.constant dense<0.000000e+00> : vector<512x32xf32>
    %3 = tpu.matmul %1, %2, %cst {dimension_numbers = #tpu.dot_dimension_numbers<[1], [0], [0], [1], [0, 0, 1, 1], [], []>} : vector<512x10xbf16>, vector<10x32xbf16>, vector<512x32xf32> -> vector<512x32xf32>
    %c0_3 = arith.constant 0 : index
    %c0_4 = arith.constant 0 : index
    %4 = vector.load %arg4[%c0_3, %c0_4] : memref<1x32xf32, #tpu.memory_space<vmem>>, vector<1x32xf32>
    %5 = vector.broadcast %4 : vector<1x32xf32> to vector<512x32xf32>
    %6 = arith.addf %3, %5 : vector<512x32xf32>
    %cst_5 = arith.constant dense<0.000000e+00> : vector<512xf32>
    %7 = vector.multi_reduction <add>, %6, %cst_5 [1] : vector<512x32xf32> to vector<512xf32>
    %8 = vector.shape_cast %7 : vector<512xf32> to vector<512x1xf32>
    %cst_6 = arith.constant 3.200000e+01 : f32
    %9 = vector.broadcast %cst_6 : f32 to vector<512x1xf32>
    %10 = arith.divf %8, %9 : vector<512x1xf32>
    %11 = vector.broadcast %10 : vector<512x1xf32> to vector<512x32xf32>
    %12 = arith.subf %6, %11 : vector<512x32xf32>
    %13 = arith.mulf %12, %12 : vector<512x32xf32>
    %cst_7 = arith.constant dense<0.000000e+00> : vector<512xf32>
    %14 = vector.multi_reduction <add>, %13, %cst_7 [1] : vector<512x32xf32> to vector<512xf32>
    %15 = vector.shape_cast %14 : vector<512xf32> to vector<512x1xf32>
    %cst_8 = arith.constant 3.200000e+01 : f32
    %16 = vector.broadcast %cst_8 : f32 to vector<512x1xf32>
    %17 = arith.divf %15, %16 : vector<512x1xf32>
    %18 = vector.broadcast %10 : vector<512x1xf32> to vector<512x32xf32>
    %19 = arith.subf %6, %18 : vector<512x32xf32>
    %cst_9 = arith.constant 9.99999974E-6 : f32
    %20 = vector.broadcast %cst_9 : f32 to vector<512x1xf32>
    %21 = arith.addf %17, %20 : vector<512x1xf32>
    %22 = math.rsqrt %21 : vector<512x1xf32>
    %23 = vector.broadcast %22 : vector<512x1xf32> to vector<512x32xf32>
    %24 = arith.mulf %19, %23 : vector<512x32xf32>
    %c0_10 = arith.constant 0 : index
    %c0_11 = arith.constant 0 : index
    %25 = vector.load %arg5[%c0_10, %c0_11] : memref<1x32xf32, #tpu.memory_space<vmem>>, vector<1x32xf32>
    %26 = vector.broadcast %25 : vector<1x32xf32> to vector<512x32xf32>
    %27 = arith.mulf %24, %26 : vector<512x32xf32>
    %c0_12 = arith.constant 0 : index
    %c0_13 = arith.constant 0 : index
    %28 = vector.load %arg6[%c0_12, %c0_13] : memref<1x32xf32, #tpu.memory_space<vmem>>, vector<1x32xf32>
    %29 = vector.broadcast %28 : vector<1x32xf32> to vector<512x32xf32>
    %30 = arith.addf %27, %29 : vector<512x32xf32>
    %cst_14 = arith.constant 5.000000e-01 : f32
    %31 = vector.broadcast %cst_14 : f32 to vector<512x32xf32>
    %32 = arith.mulf %31, %30 : vector<512x32xf32>
    %cst_15 = arith.constant 0.707106769 : f32
    %33 = vector.broadcast %cst_15 : f32 to vector<512x32xf32>
    %34 = arith.mulf %30, %33 : vector<512x32xf32>
    %35 = math.erf %34 : vector<512x32xf32>
    %cst_16 = arith.constant 1.000000e+00 : f32
    %36 = vector.broadcast %cst_16 : f32 to vector<512x32xf32>
    %37 = arith.addf %36, %35 : vector<512x32xf32>
    %38 = arith.mulf %32, %37 : vector<512x32xf32>
    %39 = arith.truncf %38 : vector<512x32xf32> to vector<512x32xbf16>
    %c0_17 = arith.constant 0 : index
    %c0_18 = arith.constant 0 : index
    %40 = vector.load %arg7[%c0_17, %c0_18] : memref<512x32xbf16, #tpu.memory_space<vmem>>, vector<512x32xbf16>
    tpu.vector_store %arg7[%c0_17, %c0_18], %39 {strides = array<i32>} : memref<512x32xbf16, #tpu.memory_space<vmem>>, vector<512x32xbf16>,
    return
  }
  func.func @transform_0(%arg0: i32, %arg1: i32) -> (i32, i32) {
    %c0_i32 = arith.constant 0 : i32
    %c0_i32_0 = arith.constant 0 : i32
    return %arg1, %c0_i32 : i32, i32
  }
  func.func @transform_1(%arg0: i32, %arg1: i32) -> (i32, i32) {
    %c0_i32 = arith.constant 0 : i32
    %c0_i32_0 = arith.constant 0 : i32
    return %c0_i32, %arg0 : i32, i32
  }
  func.func @transform_2(%arg0: i32, %arg1: i32) -> (i32, i32) {
    %c0_i32 = arith.constant 0 : i32
    %c0_i32_0 = arith.constant 0 : i32
    return %c0_i32, %arg0 : i32, i32
  }
  func.func @transform_3(%arg0: i32, %arg1: i32) -> (i32, i32) {
    %c0_i32 = arith.constant 0 : i32
    %c0_i32_0 = arith.constant 0 : i32
    return %c0_i32, %arg0 : i32, i32
  }
  func.func @transform_4(%arg0: i32, %arg1: i32) -> (i32, i32) {
    %c0_i32 = arith.constant 0 : i32
    %c0_i32_0 = arith.constant 0 : i32
    return %c0_i32, %arg0 : i32, i32
  }
  func.func @transform_5(%arg0: i32, %arg1: i32) -> (i32, i32) {
    %c0_i32 = arith.constant 0 : i32
    return %arg1, %arg0 : i32, i32
  }
}

</mosaic_0001>

<llo_original>
// kernel: tpu_custom_call.1
$region0: #{tpu_custom_call.1}
  #allocation0 [shape = 'u32[]', space=smem, size = 0x4, offset = 0x4, fixed_abs, tag = 'smem constant byte address 0x4 - core index']
  #allocation1 [shape = 'u32[144,128]{1,0:T(1,128)}', space=vmem, size = 0x12000, scoped, tag = 'internal scratch']
  %s0 = inlined_call_operand.vmem [shape: f32[1278,10], index: 0, kind: input, shape index: {}]
  %s1 = inlined_call_operand.vmem [shape: bf16[10,32], index: 1, kind: input, shape index: {}]
  %s2 = inlined_call_operand.vmem [shape: f32[1,32], index: 2, kind: input, shape index: {}]
  %s3 = inlined_call_operand.vmem [shape: f32[1,32], index: 3, kind: input, shape index: {}]
  %s4 = inlined_call_operand.vmem [shape: f32[1,32], index: 4, kind: input, shape index: {}]
  %s5 = inlined_call_operand.vmem [shape: bf16[1278,32], index: 5, kind: output, shape index: {}]
  %s6 = sld [smem:[#allocation0]]
  $region97: #{tpu_custom_call.1} parent=0
    _
  %s8 = ssub.s32 1, %s6
  %s9 = scalar_select 0, %s8, %s6
  $region1: #{tpu_custom_call.1} parent=0
    #allocation2 [shape = 'u8[262144]{0}', space=vmem, size = 0x40000, scoped, tag = 'output window, operand 0']
    loop: start=0, step=1, limit=5
    $region2: #{tpu_custom_call.1} parent=1 // loop_pre_header
      _
    $region3: #{tpu_custom_call.1} parent=1 // loop_header
      %s11 = sphi 0, %s15
      %p12 = scmp.ge.s32.totalorder %s11, 5
      %s18 = sphi 0, %s30
      %s19 = sphi 0, %s26
      %s20 = sphi 0, %s18
      %s21 = sphi 0, %s19
      %s22 = sphi 0, %s20
      %s23 = sphi 0, %s21
      %s33 = sphi 0, %s35
      %s36 = sphi 0, %s33
      %s37 = sphi 0, %s36
      %s53 = sphi 0, %s37
      %s59 = sphi 0, %s61
      %s62 = sphi 0, %s59
      %s63 = sphi 0, %s62
      %s79 = sphi 0, %s63
      %s85 = sphi 0, %s87
      %s88 = sphi 0, %s85
      %s89 = sphi 0, %s88
      %s105 = sphi 0, %s89
      %s111 = sphi 0, %s113
      %s114 = sphi 0, %s111
      %s115 = sphi 0, %s114
      %s131 = sphi 0, %s115
      %s137 = sphi 0, %s139
      %s140 = sphi 0, %s137
      %s141 = sphi 0, %s140
      %s157 = sphi 0, %s141
      %s165 = sphi 0, %s167
      %s168 = sphi 0, %s165
      %s169 = sphi 0, %s168
      %s185 = sphi 0, %s169
    $region4: #{tpu_custom_call.1} parent=1 // loop_header_branch
      %14 = sbr.rel (%p12) target = $region8
    $region5: #{tpu_custom_call.1} parent=1 // loop_body
      %s16 = ssub.s32 %s11, 1
      %s17 = ssub.s32 %s11, 2
      %s24 = sadd.s32 1, %s19
      %p25 = scmp.ge.s32.totalorder %s24, 3
      %s26 = scalar_select %p25, 0, %s24
      %s27 = sadd.s32 1, %s18
      %s28 = scalar_select %p25, %s27, %s18
      %p29 = scmp.ge.s32.totalorder %s28, 1
      %s30 = scalar_select %p29, 0, %s28
      %s31 = ssub.s32 %s19, %s26
      %p32 = scmp.eq.s32.totalorder %s31, 0
      %s34 = sadd.s32 %s33, 1
      %s35 = scalar_select %p32, %s33, %s34
      %p38 = pneg %p32
      %p39 = scmp.eq.s32.totalorder %s11, 2
      %p40 = por %p38, %p39
      %p41 = scmp.ne.s32.totalorder %s33, %s36
      %p42 = scmp.eq.s32.totalorder %s11, 0
      %p43 = por %p41, %p42
      %p44 = scmp.ne.s32.totalorder %s33, %s36
      %p45 = scmp.eq.s32.totalorder %s16, 2
      %p46 = por %p44, %p45
      %p47 = scmp.ne.s32.totalorder %s36, %s37
      %p48 = scmp.eq.s32.totalorder %s16, 0
      %p49 = por %p47, %p48
      %p50 = scmp.ne.s32.totalorder %s36, %s37
      %p51 = scmp.eq.s32.totalorder %s17, 2
      %p52 = por %p50, %p51
      %p54 = scmp.ne.s32.totalorder %s37, %s53
      %p55 = scmp.eq.s32.totalorder %s17, 0
      %p56 = por %p54, %p55
      %s57 = ssub.s32 %s18, %s30
      %p58 = scmp.eq.s32.totalorder %s57, 0
      %s60 = sadd.s32 %s59, 1
      %s61 = scalar_select %p58, %s59, %s60
      %p64 = pneg %p58
      %p65 = scmp.eq.s32.totalorder %s11, 2
      %p66 = por %p64, %p65
      %p67 = scmp.ne.s32.totalorder %s59, %s62
      %p68 = scmp.eq.s32.totalorder %s11, 0
      %p69 = por %p67, %p68
      %p70 = scmp.ne.s32.totalorder %s59, %s62
      %p71 = scmp.eq.s32.totalorder %s16, 2
      %p72 = por %p70, %p71
      %p73 = scmp.ne.s32.totalorder %s62, %s63
      %p74 = scmp.eq.s32.totalorder %s16, 0
      %p75 = por %p73, %p74
      %p76 = scmp.ne.s32.totalorder %s62, %s63
      %p77 = scmp.eq.s32.totalorder %s17, 2
      %p78 = por %p76, %p77
      %p80 = scmp.ne.s32.totalorder %s63, %s79
      %p81 = scmp.eq.s32.totalorder %s17, 0
      %p82 = por %p80, %p81
      %s83 = ssub.s32 %s18, %s30
      %p84 = scmp.eq.s32.totalorder %s83, 0
      %s86 = sadd.s32 %s85, 1
      %s87 = scalar_select %p84, %s85, %s86
      %p90 = pneg %p84
      %p91 = scmp.eq.s32.totalorder %s11, 2
      %p92 = por %p90, %p91
      %p93 = scmp.ne.s32.totalorder %s85, %s88
      %p94 = scmp.eq.s32.totalorder %s11, 0
      %p95 = por %p93, %p94
      %p96 = scmp.ne.s32.totalorder %s85, %s88
      %p97 = scmp.eq.s32.totalorder %s16, 2
      %p98 = por %p96, %p97
      %p99 = scmp.ne.s32.totalorder %s88, %s89
      %p100 = scmp.eq.s32.totalorder %s16, 0
      %p101 = por %p99, %p100
      %p102 = scmp.ne.s32.totalorder %s88, %s89
      %p103 = scmp.eq.s32.totalorder %s17, 2
      %p104 = por %p102, %p103
      %p106 = scmp.ne.s32.totalorder %s89, %s105
      %p107 = scmp.eq.s32.totalorder %s17, 0
      %p108 = por %p106, %p107
      %s109 = ssub.s32 %s18, %s30
      %p110 = scmp.eq.s32.totalorder %s109, 0
      %s112 = sadd.s32 %s111, 1
      %s113 = scalar_select %p110, %s111, %s112
      %p116 = pneg %p110
      %p117 = scmp.eq.s32.totalorder %s11, 2
      %p118 = por %p116, %p117
      %p119 = scmp.ne.s32.totalorder %s111, %s114
      %p120 = scmp.eq.s32.totalorder %s11, 0
      %p121 = por %p119, %p120
      %p122 = scmp.ne.s32.totalorder %s111, %s114
      %p123 = scmp.eq.s32.totalorder %s16, 2
      %p124 = por %p122, %p123
      %p125 = scmp.ne.s32.totalorder %s114, %s115
      %p126 = scmp.eq.s32.totalorder %s16, 0
      %p127 = por %p125, %p126
      %p128 = scmp.ne.s32.totalorder %s114, %s115
      %p129 = scmp.eq.s32.totalorder %s17, 2
      %p130 = por %p128, %p129
      %p132 = scmp.ne.s32.totalorder %s115, %s131
      %p133 = scmp.eq.s32.totalorder %s17, 0
      %p134 = por %p132, %p133
      %s135 = ssub.s32 %s18, %s30
      %p136 = scmp.eq.s32.totalorder %s135, 0
      %s138 = sadd.s32 %s137, 1
      %s139 = scalar_select %p136, %s137, %s138
      %p142 = pneg %p136
      %p143 = scmp.eq.s32.totalorder %s11, 2
      %p144 = por %p142, %p143
      %p145 = scmp.ne.s32.totalorder %s137, %s140
      %p146 = scmp.eq.s32.totalorder %s11, 0
      %p147 = por %p145, %p146
      %p148 = scmp.ne.s32.totalorder %s137, %s140
      %p149 = scmp.eq.s32.totalorder %s16, 2
      %p150 = por %p148, %p149
      %p151 = scmp.ne.s32.totalorder %s140, %s141
      %p152 = scmp.eq.s32.totalorder %s16, 0
      %p153 = por %p151, %p152
      %p154 = scmp.ne.s32.totalorder %s140, %s141
      %p155 = scmp.eq.s32.totalorder %s17, 2
      %p156 = por %p154, %p155
      %p158 = scmp.ne.s32.totalorder %s141, %s157
      %p159 = scmp.eq.s32.totalorder %s17, 0
      %p160 = por %p158, %p159
      %s161 = ssub.s32 %s19, %s26
      %s162 = ssub.s32 %s18, %s30
      %s163 = sor.u32 %s161, %s162
      %p164 = scmp.eq.s32.totalorder %s163, 0
      %s166 = sadd.s32 %s165, 1
      %s167 = scalar_select %p164, %s165, %s166
      %p170 = pneg %p164
      %p171 = scmp.eq.s32.totalorder %s11, 2
      %p172 = por %p170, %p171
      %p173 = scmp.ne.s32.totalorder %s165, %s168
      %p174 = scmp.eq.s32.totalorder %s11, 0
      %p175 = por %p173, %p174
      %p176 = scmp.ne.s32.totalorder %s165, %s168
      %p177 = scmp.eq.s32.totalorder %s16, 2
      %p178 = por %p176, %p177
      %p179 = scmp.ne.s32.totalorder %s168, %s169
      %p180 = scmp.eq.s32.totalorder %s16, 0
      %p181 = por %p179, %p180
      %p182 = scmp.ne.s32.totalorder %s168, %s169
      %p183 = scmp.eq.s32.totalorder %s17, 2
      %p184 = por %p182, %p183
      %p186 = scmp.ne.s32.totalorder %s169, %s185
      %p187 = scmp.eq.s32.totalorder %s17, 0
      %p188 = por %p186, %p187
      %p189 = scmp.le.s32.totalorder 1, %s11
      %p190 = scmp.lt.s32.totalorder %s11, 4
      %p191 = pnand %p189, %p190
      %p192 = pneg %p191
      // Predicated region
      $region9: #{tpu_custom_call.1} parent=5 // pred_check
        _
      $region10: #{tpu_custom_call.1} parent=5 // pred_check_branch
        %194 = sbr.rel (%p191) target = $region12
      $region11: #{tpu_custom_call.1} parent=5 // pred_region
        %s195 = ssub.s32 %s11, 1
        // Predicated region
        $region13: #{tpu_custom_call.1} parent=11 // pred_check
          %p196 = pneg %p75
        $region14: #{tpu_custom_call.1} parent=11 // pred_check_branch
          %198 = sbr.rel (%p196) target = $region16
        $region15: #{tpu_custom_call.1} parent=11 // pred_region
          %p199 = scmp.lt.s32.totalorder %s20, 0
          %s200 = scalar_select %p199, %s20, 0
          %s201 = smul.addr %s200, 4
          %s202 = scalar_lea.vmem %s1, %s201
        $region16: #{tpu_custom_call.1} parent=11 // pred_fallthru
          _
        // Predicated region
        $region17: #{tpu_custom_call.1} parent=11 // pred_check
          %p203 = pneg %p101
        $region18: #{tpu_custom_call.1} parent=11 // pred_check_branch
          %205 = sbr.rel (%p203) target = $region20
        $region19: #{tpu_custom_call.1} parent=11 // pred_region
          %p206 = scmp.lt.s32.totalorder %s20, 0
          %s207 = scalar_select %p206, %s20, 0
          %s208 = scalar_lea.vmem %s2, %s207
        $region20: #{tpu_custom_call.1} parent=11 // pred_fallthru
          _
        // Predicated region
        $region21: #{tpu_custom_call.1} parent=11 // pred_check
          %p209 = pneg %p127
        $region22: #{tpu_custom_call.1} parent=11 // pred_check_branch
          %211 = sbr.rel (%p209) target = $region24
        $region23: #{tpu_custom_call.1} parent=11 // pred_region
          %p212 = scmp.lt.s32.totalorder %s20, 0
          %s213 = scalar_select %p212, %s20, 0
          %s214 = scalar_lea.vmem %s3, %s213
        $region24: #{tpu_custom_call.1} parent=11 // pred_fallthru
          _
        // Predicated region
        $region25: #{tpu_custom_call.1} parent=11 // pred_check
          %p215 = pneg %p153
        $region26: #{tpu_custom_call.1} parent=11 // pred_check_branch
          %217 = sbr.rel (%p215) target = $region28
        $region27: #{tpu_custom_call.1} parent=11 // pred_region
          %p218 = scmp.lt.s32.totalorder %s20, 0
          %s219 = scalar_select %p218, %s20, 0
          %s220 = scalar_lea.vmem %s4, %s219
        $region28: #{tpu_custom_call.1} parent=11 // pred_fallthru
          _
      $region12: #{tpu_custom_call.1} parent=5 // pred_fallthru
        _
      %p221 = scmp.lt.s32.totalorder %s11, 3
      // Predicated region
      $region29: #{tpu_custom_call.1} parent=5 // pred_check
        %p222 = pneg %p221
      $region30: #{tpu_custom_call.1} parent=5 // pred_check_branch
        %224 = sbr.rel (%p222) target = $region32
      $region31: #{tpu_custom_call.1} parent=5 // pred_region
        // Predicated region
        $region33: #{tpu_custom_call.1} parent=31 // pred_check
          %p225 = pneg %p43
        $region34: #{tpu_custom_call.1} parent=31 // pred_check_branch
          %227 = sbr.rel (%p225) target = $region36
        $region35: #{tpu_custom_call.1} parent=31 // pred_region
          %s228 = smul.u32 64, %s19
          %s229 = ssub.s32 160, %s228
          %p230 = scmp.lt.s32.totalorder %s229, 64
          %s231 = scalar_select %p230, %s229, 64
          %s232 = smul.u32 128, %s231
          %p233 = scmp.lt.s32.totalorder %s228, 159
          %s234 = scalar_select %p233, %s228, 159
          %s235 = smul.addr %s234, 8
          %s236 = scalar_lea.vmem %s0, %s235
          %s237 = smul.u32 64, %s19
          %s238 = ssub.s32 160, %s237
          %p239 = scmp.lt.s32.totalorder %s238, 64
          %s240 = scalar_select %p239, %s238, 64
          %s241 = smul.u32 128, %s240
        $region36: #{tpu_custom_call.1} parent=31 // pred_fallthru
          _
      $region32: #{tpu_custom_call.1} parent=5 // pred_fallthru
        _
      %p242 = scmp.le.s32.totalorder 1, %s11
      %p243 = scmp.lt.s32.totalorder %s11, 4
      %p244 = pnand %p242, %p243
      %p245 = pneg %p244
      // Predicated region
      $region37: #{tpu_custom_call.1} parent=5 // pred_check
        _
      $region38: #{tpu_custom_call.1} parent=5 // pred_check_branch
        %247 = sbr.rel (%p244) target = $region40
      $region39: #{tpu_custom_call.1} parent=5 // pred_region
        %s248 = ssub.s32 %s11, 1
        %s249 = smul.u32 64, %s21
        %s250 = ssub.s32 160, %s249
        %p251 = scmp.lt.s32.totalorder %s250, 64
        %s252 = scalar_select %p251, %s250, 64
        %s253 = smul.u32 128, %s252
        %p254 = scmp.lt.s32.totalorder %s249, 159
        %s255 = scalar_select %p254, %s249, 159
        %s256 = smul.addr %s255, 8
        %s257 = scalar_lea.vmem %s0, %s256
        %p258 = pneg %p49
        %p259 = pneg %p46
        %p260 = scmp.lt.s32.totalorder %s20, 0
        %s261 = scalar_select %p260, %s20, 0
        %s262 = smul.addr %s261, 4
        %s263 = scalar_lea.vmem %s1, %s262
        %p264 = pneg %p75
        %p265 = pneg %p72
        %p266 = scmp.lt.s32.totalorder %s20, 0
        %s267 = scalar_select %p266, %s20, 0
        %s268 = scalar_lea.vmem %s2, %s267
        %p269 = pneg %p101
        %p270 = pneg %p98
        %p271 = scmp.lt.s32.totalorder %s20, 0
        %s272 = scalar_select %p271, %s20, 0
        %s273 = scalar_lea.vmem %s3, %s272
        %p274 = pneg %p127
        %p275 = pneg %p124
        %p276 = scmp.lt.s32.totalorder %s20, 0
        %s277 = scalar_select %p276, %s20, 0
        %s278 = scalar_lea.vmem %s4, %s277
        %p279 = pneg %p153
        %p280 = pneg %p150
        %p281 = pneg %p181
        %p282 = pneg %p178
        %s283 = sand.u32 %s168, 1
        %s284 = sand.u32 %s168, 1
        %s285 = smul.addr %s284, 256
        %s286 = scalar_lea.vmem [#allocation2], %s285
        %s287 = smul.u32 64, %s21
        %s288 = ssub.s32 160, %s287
        %p289 = scmp.lt.s32.totalorder %s288, 64
        %s290 = scalar_select %p289, %s288, 64
        %s291 = smul.u32 128, %s290
        %p292 = scmp.lt.s32.totalorder %s287, 159
        %s293 = scalar_select %p292, %s287, 159
        %s294 = smul.addr %s293, 8
        %s295 = scalar_lea.vmem %s0, %s294
        %s296 = smul.u32 64, %s21
        %s297 = ssub.s32 160, %s296
        %p298 = scmp.lt.s32.totalorder %s297, 64
        %s299 = scalar_select %p298, %s297, 64
        %s300 = smul.u32 128, %s299
        %p301 = scmp.lt.s32.totalorder %s20, 0
        %s302 = scalar_select %p301, %s20, 0
        %s303 = smul.addr %s302, 4
        %s304 = scalar_lea.vmem %s1, %s303
        %p305 = scmp.lt.s32.totalorder %s20, 0
        %s306 = scalar_select %p305, %s20, 0
        %s307 = scalar_lea.vmem %s2, %s306
        %p308 = scmp.lt.s32.totalorder %s20, 0
        %s309 = scalar_select %p308, %s20, 0
        %s310 = scalar_lea.vmem %s3, %s309
        %p311 = scmp.lt.s32.totalorder %s20, 0
        %s312 = scalar_select %p311, %s20, 0
        %s313 = scalar_lea.vmem %s4, %s312
        %s314 = smul.u32 64, %s21
        %s315 = ssub.s32 160, %s314
        %p316 = scmp.lt.s32.totalorder %s315, 64
        %s317 = scalar_select %p316, %s315, 64
        %s318 = smul.u32 64, %s317
        %v320 = vld [vmem:[%s295] sm:$0xff]
        %v321 = vld [vmem:[%s295 + $0x8] sm:$0xff]
        %v322 = vld [vmem:[%s295 + $0x10] sm:$0xff]
        %v323 = vld [vmem:[%s295 + $0x18] sm:$0xff]
        %v324 = vld [vmem:[%s295 + $0x20] sm:$0xff]
        %v325 = vld [vmem:[%s295 + $0x28] sm:$0xff]
        %v326 = vld [vmem:[%s295 + $0x30] sm:$0xff]
        %v327 = vld [vmem:[%s295 + $0x38] sm:$0xff]
        %v328 = vld [vmem:[%s295 + $0x40] sm:$0xff]
        %v329 = vld [vmem:[%s295 + $0x48] sm:$0xff]
        %v330 = vld [vmem:[%s295 + $0x50] sm:$0xff]
        %v331 = vld [vmem:[%s295 + $0x58] sm:$0xff]
        %v332 = vld [vmem:[%s295 + $0x60] sm:$0xff]
        %v333 = vld [vmem:[%s295 + $0x68] sm:$0xff]
        %v334 = vld [vmem:[%s295 + $0x70] sm:$0xff]
        %v335 = vld [vmem:[%s295 + $0x78] sm:$0xff]
        %v336 = vld [vmem:[%s295 + $0x80] sm:$0xff]
        %v337 = vld [vmem:[%s295 + $0x88] sm:$0xff]
        %v338 = vld [vmem:[%s295 + $0x90] sm:$0xff]
        %v339 = vld [vmem:[%s295 + $0x98] sm:$0xff]
        %v340 = vld [vmem:[%s295 + $0xa0] sm:$0xff]
        %v341 = vld [vmem:[%s295 + $0xa8] sm:$0xff]
        %v342 = vld [vmem:[%s295 + $0xb0] sm:$0xff]
        %v343 = vld [vmem:[%s295 + $0xb8] sm:$0xff]
        %v344 = vld [vmem:[%s295 + $0xc0] sm:$0xff]
        %v345 = vld [vmem:[%s295 + $0xc8] sm:$0xff]
        %v346 = vld [vmem:[%s295 + $0xd0] sm:$0xff]
        %v347 = vld [vmem:[%s295 + $0xd8] sm:$0xff]
        %v348 = vld [vmem:[%s295 + $0xe0] sm:$0xff]
        %v349 = vld [vmem:[%s295 + $0xe8] sm:$0xff]
        %v350 = vld [vmem:[%s295 + $0xf0] sm:$0xff]
        %v351 = vld [vmem:[%s295 + $0xf8] sm:$0xff]
        %v352 = vld [vmem:[%s295 + $0x100] sm:$0xff]
        %v353 = vld [vmem:[%s295 + $0x108] sm:$0xff]
        %v354 = vld [vmem:[%s295 + $0x110] sm:$0xff]
        %v355 = vld [vmem:[%s295 + $0x118] sm:$0xff]
        %v356 = vld [vmem:[%s295 + $0x120] sm:$0xff]
        %v357 = vld [vmem:[%s295 + $0x128] sm:$0xff]
        %v358 = vld [vmem:[%s295 + $0x130] sm:$0xff]
        %v359 = vld [vmem:[%s295 + $0x138] sm:$0xff]
        %v360 = vld [vmem:[%s295 + $0x140] sm:$0xff]
        %v361 = vld [vmem:[%s295 + $0x148] sm:$0xff]
        %v362 = vld [vmem:[%s295 + $0x150] sm:$0xff]
        %v363 = vld [vmem:[%s295 + $0x158] sm:$0xff]
        %v364 = vld [vmem:[%s295 + $0x160] sm:$0xff]
        %v365 = vld [vmem:[%s295 + $0x168] sm:$0xff]
        %v366 = vld [vmem:[%s295 + $0x170] sm:$0xff]
        %v367 = vld [vmem:[%s295 + $0x178] sm:$0xff]
        %v368 = vld [vmem:[%s295 + $0x180] sm:$0xff]
        %v369 = vld [vmem:[%s295 + $0x188] sm:$0xff]
        %v370 = vld [vmem:[%s295 + $0x190] sm:$0xff]
        %v371 = vld [vmem:[%s295 + $0x198] sm:$0xff]
        %v372 = vld [vmem:[%s295 + $0x1a0] sm:$0xff]
        %v373 = vld [vmem:[%s295 + $0x1a8] sm:$0xff]
        %v374 = vld [vmem:[%s295 + $0x1b0] sm:$0xff]
        %v375 = vld [vmem:[%s295 + $0x1b8] sm:$0xff]
        %v376 = vld [vmem:[%s295 + $0x1c0] sm:$0xff]
        %v377 = vld [vmem:[%s295 + $0x1c8] sm:$0xff]
        %v378 = vld [vmem:[%s295 + $0x1d0] sm:$0xff]
        %v379 = vld [vmem:[%s295 + $0x1d8] sm:$0xff]
        %v380 = vld [vmem:[%s295 + $0x1e0] sm:$0xff]
        %v381 = vld [vmem:[%s295 + $0x1e8] sm:$0xff]
        %v382 = vld [vmem:[%s295 + $0x1f0] sm:$0xff]
        %v383 = vld [vmem:[%s295 + $0x1f8] sm:$0xff]
        %v384 = vpack.c.bf16 %v321, %v320
        %v385 = vpack.c.bf16 %v323, %v322
        %v386 = vpack.c.bf16 %v325, %v324
        %v387 = vpack.c.bf16 %v327, %v326
        %v388 = vpack.c.bf16 %v329, %v328
        %v389 = vpack.c.bf16 %v331, %v330
        %v390 = vpack.c.bf16 %v333, %v332
        %v391 = vpack.c.bf16 %v335, %v334
        %v392 = vpack.c.bf16 %v337, %v336
        %v393 = vpack.c.bf16 %v339, %v338
        %v394 = vpack.c.bf16 %v341, %v340
        %v395 = vpack.c.bf16 %v343, %v342
        %v396 = vpack.c.bf16 %v345, %v344
        %v397 = vpack.c.bf16 %v347, %v346
        %v398 = vpack.c.bf16 %v349, %v348
        %v399 = vpack.c.bf16 %v351, %v350
        %v400 = vpack.c.bf16 %v353, %v352
        %v401 = vpack.c.bf16 %v355, %v354
        %v402 = vpack.c.bf16 %v357, %v356
        %v403 = vpack.c.bf16 %v359, %v358
        %v404 = vpack.c.bf16 %v361, %v360
        %v405 = vpack.c.bf16 %v363, %v362
        %v406 = vpack.c.bf16 %v365, %v364
        %v407 = vpack.c.bf16 %v367, %v366
        %v408 = vpack.c.bf16 %v369, %v368
        %v409 = vpack.c.bf16 %v371, %v370
        %v410 = vpack.c.bf16 %v373, %v372
        %v411 = vpack.c.bf16 %v375, %v374
        %v412 = vpack.c.bf16 %v377, %v376
        %v413 = vpack.c.bf16 %v379, %v378
        %v414 = vpack.c.bf16 %v381, %v380
        %v415 = vpack.c.bf16 %v383, %v382
        %v416 = vld [vmem:[%s304] sm:$0xf]
        %v417 = vld [vmem:[%s304 + $0x4] sm:$0x1]
        %v418 = vld [vmem:[%s307] sm:$0x1]
        %v420 = vlaneseq
        %v421 = vshrl.u32 %v420, 7
        %v422 = vsub.s32 0, %v421
        %v423 = vrot.slane %v418, %v422
        %v427 = vunpack.c.l.b16 %v416
        %v428 = vunpack.c.l.b16 %v417
        %v429 = vpack.c.b16 %v428, %v427
        %vm430 = vcmask 80896
        %v432 = vsel %vm430, %v384, 0
        %v435 = vsel %vm430, %v385, 0
        %v438 = vsel %vm430, %v386, 0
        %v441 = vsel %vm430, %v387, 0
        %v444 = vsel %vm430, %v388, 0
        %v447 = vsel %vm430, %v389, 0
        %v450 = vsel %vm430, %v390, 0
        %v453 = vsel %vm430, %v391, 0
        %v456 = vsel %vm430, %v392, 0
        %v459 = vsel %vm430, %v393, 0
        %v462 = vsel %vm430, %v394, 0
        %v465 = vsel %vm430, %v395, 0
        %v468 = vsel %vm430, %v396, 0
        %v471 = vsel %vm430, %v397, 0
        %v474 = vsel %vm430, %v398, 0
        %v477 = vsel %vm430, %v399, 0
        %v480 = vsel %vm430, %v400, 0
        %v483 = vsel %vm430, %v401, 0
        %v486 = vsel %vm430, %v402, 0
        %v489 = vsel %vm430, %v403, 0
        %v492 = vsel %vm430, %v404, 0
        %v495 = vsel %vm430, %v405, 0
        %v498 = vsel %vm430, %v406, 0
        %v501 = vsel %vm430, %v407, 0
        %v504 = vsel %vm430, %v408, 0
        %v507 = vsel %vm430, %v409, 0
        %v510 = vsel %vm430, %v410, 0
        %v513 = vsel %vm430, %v411, 0
        %v516 = vsel %vm430, %v412, 0
        %v519 = vsel %vm430, %v413, 0
        %v522 = vsel %vm430, %v414, 0
        %v525 = vsel %vm430, %v415, 0
        %vm527 = vcmask 1044480
        %v529 = vsel %vm527, %v429, 0
        %531 = vmatprep.subr.bf16.mxu0 0
        %532 = vmatpush1.bf16.msra.mxu0 %v529
        %533 = vmatprep.subr.bf16.mxu0 0
        %534 = vmatpush1.bf16.msra.mxu0 0
        %535 = vmatprep.subr.bf16.mxu0 0
        %536 = vmatpush1.bf16.msra.mxu0 0
        %537 = vmatprep.subr.bf16.mxu0 0
        %538 = vmatpush1.bf16.msra.mxu0 0
        %539 = vmatprep.subr.bf16.mxu0 0
        %540 = vmatpush1.bf16.msra.mxu0 0
        %541 = vmatprep.subr.bf16.mxu0 0
        %542 = vmatpush1.bf16.msra.mxu0 0
        %543 = vmatprep.subr.bf16.mxu0 0
        %544 = vmatpush1.bf16.msra.mxu0 0
        %545 = vmatprep.subr.bf16.mxu0 0
        %546 = vmatpush1.bf16.msra.mxu0 0
        %547 = vmatprep.subr.bf16.mxu0 0
        %548 = vmatpush1.bf16.msra.mxu0 0
        %549 = vmatprep.subr.bf16.mxu0 0
        %550 = vmatpush1.bf16.msra.mxu0 0
        %551 = vmatprep.subr.bf16.mxu0 0
        %552 = vmatpush1.bf16.msra.mxu0 0
        %553 = vmatprep.subr.bf16.mxu0 0
        %554 = vmatpush1.bf16.msra.mxu0 0
        %555 = vmatprep.subr.bf16.mxu0 0
        %556 = vmatpush1.bf16.msra.mxu0 0
        %557 = vmatprep.subr.bf16.mxu0 0
        %558 = vmatpush1.bf16.msra.mxu0 0
        %559 = vmatprep.subr.bf16.mxu0 0
        %560 = vmatpush1.bf16.msra.mxu0 0
        %561 = vmatprep.subr.bf16.mxu0 0
        %562 = vmatpush1.bf16.msra.mxu0 0
        %563 = vmatprep.mubr.bf16.mxu0 0
        %564 = vmatmul.mubr.bf16.gmra.mrb[0].mxu0 %v432
        %v565 = vpop.f32.mrb[0].mxu0
        %v566 = vadd.f32 %v423, %v565
        %v567 = vpop.f32.mrb[0].mxu0
        %v568 = vpop.f32.mrb[0].mxu0
        %v569 = vadd.f32 %v423, %v568
        %v570 = vpop.f32.mrb[0].mxu0
        %571 = vmatprep.mubr.bf16.mxu0 0
        %572 = vmatmul.mubr.bf16.gmra.mrb[0].mxu0 %v435
        %v573 = vpop.f32.mrb[0].mxu0
        %v574 = vadd.f32 %v423, %v573
        %v575 = vpop.f32.mrb[0].mxu0
        %v576 = vpop.f32.mrb[0].mxu0
        %v577 = vadd.f32 %v423, %v576
        %v578 = vpop.f32.mrb[0].mxu0
        %579 = vmatprep.mubr.bf16.mxu0 0
        %580 = vmatmul.mubr.bf16.gmra.mrb[0].mxu0 %v438
        %v581 = vpop.f32.mrb[0].mxu0
        %v582 = vadd.f32 %v423, %v581
        %v583 = vpop.f32.mrb[0].mxu0
        %v584 = vpop.f32.mrb[0].mxu0
        %v585 = vadd.f32 %v423, %v584
        %v586 = vpop.f32.mrb[0].mxu0
        %587 = vmatprep.mubr.bf16.mxu0 0
        %588 = vmatmul.mubr.bf16.gmra.mrb[0].mxu0 %v441
        %v589 = vpop.f32.mrb[0].mxu0
        %v590 = vadd.f32 %v423, %v589
        %v591 = vpop.f32.mrb[0].mxu0
        %v592 = vpop.f32.mrb[0].mxu0
        %v593 = vadd.f32 %v423, %v592
        %v594 = vpop.f32.mrb[0].mxu0
        %595 = vmatprep.mubr.bf16.mxu0 0
        %596 = vmatmul.mubr.bf16.gmra.mrb[0].mxu0 %v444
        %v597 = vpop.f32.mrb[0].mxu0
        %v598 = vadd.f32 %v423, %v597
        %v599 = vpop.f32.mrb[0].mxu0
        %v600 = vpop.f32.mrb[0].mxu0
        %v601 = vadd.f32 %v423, %v600
        %v602 = vpop.f32.mrb[0].mxu0
        %603 = vmatprep.mubr.bf16.mxu0 0
        %604 = vmatmul.mubr.bf16.gmra.mrb[0].mxu0 %v447
        %v605 = vpop.f32.mrb[0].mxu0
        %v606 = vadd.f32 %v423, %v605
        %v607 = vpop.f32.mrb[0].mxu0
        %v608 = vpop.f32.mrb[0].mxu0
        %v609 = vadd.f32 %v423, %v608
        %v610 = vpop.f32.mrb[0].mxu0
        %611 = vmatprep.mubr.bf16.mxu0 0
        %612 = vmatmul.mubr.bf16.gmra.mrb[0].mxu0 %v450
        %v613 = vpop.f32.mrb[0].mxu0
        %v614 = vadd.f32 %v423, %v613
        %v615 = vpop.f32.mrb[0].mxu0
        %v616 = vpop.f32.mrb[0].mxu0
        %v617 = vadd.f32 %v423, %v616
        %v618 = vpop.f32.mrb[0].mxu0
        %619 = vmatprep.mubr.bf16.mxu0 0
        %620 = vmatmul.mubr.bf16.gmra.mrb[0].mxu0 %v453
        %v621 = vpop.f32.mrb[0].mxu0
        %v622 = vadd.f32 %v423, %v621
        %v623 = vpop.f32.mrb[0].mxu0
        %v624 = vpop.f32.mrb[0].mxu0
        %v625 = vadd.f32 %v423, %v624
        %v626 = vpop.f32.mrb[0].mxu0
        %627 = vmatprep.mubr.bf16.mxu0 0
        %628 = vmatmul.mubr.bf16.gmra.mrb[0].mxu0 %v456
        %v629 = vpop.f32.mrb[0].mxu0
        %v630 = vadd.f32 %v423, %v629
        %v631 = vpop.f32.mrb[0].mxu0
        %v632 = vpop.f32.mrb[0].mxu0
        %v633 = vadd.f32 %v423, %v632
        %v634 = vpop.f32.mrb[0].mxu0
        %635 = vmatprep.mubr.bf16.mxu0 0
        %636 = vmatmul.mubr.bf16.gmra.mrb[0].mxu0 %v459
        %v637 = vpop.f32.mrb[0].mxu0
        %v638 = vadd.f32 %v423, %v637
        %v639 = vpop.f32.mrb[0].mxu0
        %v640 = vpop.f32.mrb[0].mxu0
        %v641 = vadd.f32 %v423, %v640
        %v642 = vpop.f32.mrb[0].mxu0
        %643 = vmatprep.mubr.bf16.mxu0 0
        %644 = vmatmul.mubr.bf16.gmra.mrb[0].mxu0 %v462
        %v645 = vpop.f32.mrb[0].mxu0
        %v646 = vadd.f32 %v423, %v645
        %v647 = vpop.f32.mrb[0].mxu0
        %v648 = vpop.f32.mrb[0].mxu0
        %v649 = vadd.f32 %v423, %v648
        %v650 = vpop.f32.mrb[0].mxu0
        %651 = vmatprep.mubr.bf16.mxu0 0
        %652 = vmatmul.mubr.bf16.gmra.mrb[0].mxu0 %v465
        %v653 = vpop.f32.mrb[0].mxu0
        %v654 = vadd.f32 %v423, %v653
        %v655 = vpop.f32.mrb[0].mxu0
        %v656 = vpop.f32.mrb[0].mxu0
        %v657 = vadd.f32 %v423, %v656
        %v658 = vpop.f32.mrb[0].mxu0
        %659 = vmatprep.mubr.bf16.mxu0 0
        %660 = vmatmul.mubr.bf16.gmra.mrb[0].mxu0 %v468
        %v661 = vpop.f32.mrb[0].mxu0
        %v662 = vadd.f32 %v423, %v661
        %v663 = vpop.f32.mrb[0].mxu0
        %v664 = vpop.f32.mrb[0].mxu0
        %v665 = vadd.f32 %v423, %v664
        %v666 = vpop.f32.mrb[0].mxu0
        %667 = vmatprep.mubr.bf16.mxu0 0
        %668 = vmatmul.mubr.bf16.gmra.mrb[0].mxu0 %v471
        %v669 = vpop.f32.mrb[0].mxu0
        %v670 = vadd.f32 %v423, %v669
        %v671 = vpop.f32.mrb[0].mxu0
        %v672 = vpop.f32.mrb[0].mxu0
        %v673 = vadd.f32 %v423, %v672
        %v674 = vpop.f32.mrb[0].mxu0
        %675 = vmatprep.mubr.bf16.mxu0 0
        %676 = vmatmul.mubr.bf16.gmra.mrb[0].mxu0 %v474
        %v677 = vpop.f32.mrb[0].mxu0
        %v678 = vadd.f32 %v423, %v677
        %v679 = vpop.f32.mrb[0].mxu0
        %v680 = vpop.f32.mrb[0].mxu0
        %v681 = vadd.f32 %v423, %v680
        %v682 = vpop.f32.mrb[0].mxu0
        %683 = vmatprep.mubr.bf16.mxu0 0
        %684 = vmatmul.mubr.bf16.gmra.mrb[0].mxu0 %v477
        %v685 = vpop.f32.mrb[0].mxu0
        %v686 = vadd.f32 %v423, %v685
        %v687 = vpop.f32.mrb[0].mxu0
        %v688 = vpop.f32.mrb[0].mxu0
        %v689 = vadd.f32 %v423, %v688
        %v690 = vpop.f32.mrb[0].mxu0
        %691 = vmatprep.mubr.bf16.mxu0 0
        %692 = vmatmul.mubr.bf16.gmra.mrb[0].mxu0 %v480
        %v693 = vpop.f32.mrb[0].mxu0
        %v694 = vadd.f32 %v423, %v693
        %v695 = vpop.f32.mrb[0].mxu0
        %v696 = vpop.f32.mrb[0].mxu0
        %v697 = vadd.f32 %v423, %v696
        %v698 = vpop.f32.mrb[0].mxu0
        %699 = vmatprep.mubr.bf16.mxu0 0
        %700 = vmatmul.mubr.bf16.gmra.mrb[0].mxu0 %v483
        %v701 = vpop.f32.mrb[0].mxu0
        %v702 = vadd.f32 %v423, %v701
        %v703 = vpop.f32.mrb[0].mxu0
        %v704 = vpop.f32.mrb[0].mxu0
        %v705 = vadd.f32 %v423, %v704
        %v706 = vpop.f32.mrb[0].mxu0
        %707 = vmatprep.mubr.bf16.mxu0 0
        %708 = vmatmul.mubr.bf16.gmra.mrb[0].mxu0 %v486
        %v709 = vpop.f32.mrb[0].mxu0
        %v710 = vadd.f32 %v423, %v709
        %v711 = vpop.f32.mrb[0].mxu0
        %v712 = vpop.f32.mrb[0].mxu0
        %v713 = vadd.f32 %v423, %v712
        %v714 = vpop.f32.mrb[0].mxu0
        %715 = vmatprep.mubr.bf16.mxu0 0
        %716 = vmatmul.mubr.bf16.gmra.mrb[0].mxu0 %v489
        %v717 = vpop.f32.mrb[0].mxu0
        %v718 = vadd.f32 %v423, %v717
        %v719 = vpop.f32.mrb[0].mxu0
        %v720 = vpop.f32.mrb[0].mxu0
        %v721 = vadd.f32 %v423, %v720
        %v722 = vpop.f32.mrb[0].mxu0
        %723 = vmatprep.mubr.bf16.mxu0 0
        %724 = vmatmul.mubr.bf16.gmra.mrb[0].mxu0 %v492
        %v725 = vpop.f32.mrb[0].mxu0
        %v726 = vadd.f32 %v423, %v725
        %v727 = vpop.f32.mrb[0].mxu0
        %v728 = vpop.f32.mrb[0].mxu0
        %v729 = vadd.f32 %v423, %v728
        %v730 = vpop.f32.mrb[0].mxu0
        %731 = vmatprep.mubr.bf16.mxu0 0
        %732 = vmatmul.mubr.bf16.gmra.mrb[0].mxu0 %v495
        %v733 = vpop.f32.mrb[0].mxu0
        %v734 = vadd.f32 %v423, %v733
        %v735 = vpop.f32.mrb[0].mxu0
        %v736 = vpop.f32.mrb[0].mxu0
        %v737 = vadd.f32 %v423, %v736
        %v738 = vpop.f32.mrb[0].mxu0
        %739 = vmatprep.mubr.bf16.mxu0 0
        %740 = vmatmul.mubr.bf16.gmra.mrb[0].mxu0 %v498
        %v741 = vpop.f32.mrb[0].mxu0
        %v742 = vadd.f32 %v423, %v741
        %v743 = vpop.f32.mrb[0].mxu0
        %v744 = vpop.f32.mrb[0].mxu0
        %v745 = vadd.f32 %v423, %v744
        %v746 = vpop.f32.mrb[0].mxu0
        %747 = vmatprep.mubr.bf16.mxu0 0
        %748 = vmatmul.mubr.bf16.gmra.mrb[0].mxu0 %v501
        %v749 = vpop.f32.mrb[0].mxu0
        %v750 = vadd.f32 %v423, %v749
        %v751 = vpop.f32.mrb[0].mxu0
        %v752 = vpop.f32.mrb[0].mxu0
        %v753 = vadd.f32 %v423, %v752
        %v754 = vpop.f32.mrb[0].mxu0
        %755 = vmatprep.mubr.bf16.mxu0 0
        %756 = vmatmul.mubr.bf16.gmra.mrb[0].mxu0 %v504
        %v757 = vpop.f32.mrb[0].mxu0
        %v758 = vadd.f32 %v423, %v757
        %v759 = vpop.f32.mrb[0].mxu0
        %v760 = vpop.f32.mrb[0].mxu0
        %v761 = vadd.f32 %v423, %v760
        %v762 = vpop.f32.mrb[0].mxu0
        %763 = vmatprep.mubr.bf16.mxu0 0
        %764 = vmatmul.mubr.bf16.gmra.mrb[0].mxu0 %v507
        %v765 = vpop.f32.mrb[0].mxu0
        %v766 = vadd.f32 %v423, %v765
        %v767 = vpop.f32.mrb[0].mxu0
        %v768 = vpop.f32.mrb[0].mxu0
        %v769 = vadd.f32 %v423, %v768
        %v770 = vpop.f32.mrb[0].mxu0
        %771 = vmatprep.mubr.bf16.mxu0 0
        %772 = vmatmul.mubr.bf16.gmra.mrb[0].mxu0 %v510
        %v773 = vpop.f32.mrb[0].mxu0
        %v774 = vadd.f32 %v423, %v773
        %v775 = vpop.f32.mrb[0].mxu0
        %v776 = vpop.f32.mrb[0].mxu0
        %v777 = vadd.f32 %v423, %v776
        %v778 = vpop.f32.mrb[0].mxu0
        %779 = vmatprep.mubr.bf16.mxu0 0
        %780 = vmatmul.mubr.bf16.gmra.mrb[0].mxu0 %v513
        %v781 = vpop.f32.mrb[0].mxu0
        %v782 = vadd.f32 %v423, %v781
        %v783 = vpop.f32.mrb[0].mxu0
        %v784 = vpop.f32.mrb[0].mxu0
        %v785 = vadd.f32 %v423, %v784
        %v786 = vpop.f32.mrb[0].mxu0
        %787 = vmatprep.mubr.bf16.mxu0 0
        %788 = vmatmul.mubr.bf16.gmra.mrb[0].mxu0 %v516
        %v789 = vpop.f32.mrb[0].mxu0
        %v790 = vadd.f32 %v423, %v789
        %v791 = vpop.f32.mrb[0].mxu0
        %v792 = vpop.f32.mrb[0].mxu0
        %v793 = vadd.f32 %v423, %v792
        %v794 = vpop.f32.mrb[0].mxu0
        %795 = vmatprep.mubr.bf16.mxu0 0
        %796 = vmatmul.mubr.bf16.gmra.mrb[0].mxu0 %v519
        %v797 = vpop.f32.mrb[0].mxu0
        %v798 = vadd.f32 %v423, %v797
        %v799 = vpop.f32.mrb[0].mxu0
        %v800 = vpop.f32.mrb[0].mxu0
        %v801 = vadd.f32 %v423, %v800
        %v802 = vpop.f32.mrb[0].mxu0
        %803 = vmatprep.mubr.bf16.mxu0 0
        %804 = vmatmul.mubr.bf16.gmra.mrb[0].mxu0 %v522
        %v805 = vpop.f32.mrb[0].mxu0
        %v806 = vadd.f32 %v423, %v805
        %v807 = vpop.f32.mrb[0].mxu0
        %v808 = vpop.f32.mrb[0].mxu0
        %v809 = vadd.f32 %v423, %v808
        %v810 = vpop.f32.mrb[0].mxu0
        %811 = vmatprep.mubr.bf16.mxu0 0
        %812 = vmatmul.mubr.bf16.gmra.mrb[0].mxu0 %v525
        %v813 = vpop.f32.mrb[0].mxu0
        %v814 = vadd.f32 %v423, %v813
        %v815 = vpop.f32.mrb[0].mxu0
        %v816 = vpop.f32.mrb[0].mxu0
        %v817 = vadd.f32 %v423, %v816
        %v818 = vpop.f32.mrb[0].mxu0
        %819 = vdwg.mxu0
        %vm820 = vcmask 261120
        %v821 = vsel %vm820, %v566, 0.0
        %822 = vadd.xlane.f32.xlu0 %v821
        %v823 = vpop.xlane.xlu0 %822
        %v824 = vsel %vm820, %v569, 0.0
        %825 = vadd.xlane.f32.xlu0 %v824
        %v826 = vpop.xlane.xlu0 %825
        %v827 = vsel %vm820, %v574, 0.0
        %828 = vadd.xlane.f32.xlu0 %v827
        %v829 = vpop.xlane.xlu0 %828
        %v830 = vsel %vm820, %v577, 0.0
        %831 = vadd.xlane.f32.xlu0 %v830
        %v832 = vpop.xlane.xlu0 %831
        %v833 = vsel %vm820, %v582, 0.0
        %834 = vadd.xlane.f32.xlu0 %v833
        %v835 = vpop.xlane.xlu0 %834
        %v836 = vsel %vm820, %v585, 0.0
        %837 = vadd.xlane.f32.xlu0 %v836
        %v838 = vpop.xlane.xlu0 %837
        %v839 = vsel %vm820, %v590, 0.0
        %840 = vadd.xlane.f32.xlu0 %v839
        %v841 = vpop.xlane.xlu0 %840
        %v842 = vsel %vm820, %v593, 0.0
        %843 = vadd.xlane.f32.xlu0 %v842
        %v844 = vpop.xlane.xlu0 %843
        %v845 = vsel %vm820, %v598, 0.0
        %846 = vadd.xlane.f32.xlu0 %v845
        %v847 = vpop.xlane.xlu0 %846
        %v848 = vsel %vm820, %v601, 0.0
        %849 = vadd.xlane.f32.xlu0 %v848
        %v850 = vpop.xlane.xlu0 %849
        %v851 = vsel %vm820, %v606, 0.0
        %852 = vadd.xlane.f32.xlu0 %v851
        %v853 = vpop.xlane.xlu0 %852
        %v854 = vsel %vm820, %v609, 0.0
        %855 = vadd.xlane.f32.xlu0 %v854
        %v856 = vpop.xlane.xlu0 %855
        %v857 = vsel %vm820, %v614, 0.0
        %858 = vadd.xlane.f32.xlu0 %v857
        %v859 = vpop.xlane.xlu0 %858
        %v860 = vsel %vm820, %v617, 0.0
        %861 = vadd.xlane.f32.xlu0 %v860
        %v862 = vpop.xlane.xlu0 %861
        %v863 = vsel %vm820, %v622, 0.0
        %864 = vadd.xlane.f32.xlu0 %v863
        %v865 = vpop.xlane.xlu0 %864
        %v866 = vsel %vm820, %v625, 0.0
        %867 = vadd.xlane.f32.xlu0 %v866
        %v868 = vpop.xlane.xlu0 %867
        %v869 = vsel %vm820, %v630, 0.0
        %870 = vadd.xlane.f32.xlu0 %v869
        %v871 = vpop.xlane.xlu0 %870
        %v872 = vsel %vm820, %v633, 0.0
        %873 = vadd.xlane.f32.xlu0 %v872
        %v874 = vpop.xlane.xlu0 %873
        %v875 = vsel %vm820, %v638, 0.0
        %876 = vadd.xlane.f32.xlu0 %v875
        %v877 = vpop.xlane.xlu0 %876
        %v878 = vsel %vm820, %v641, 0.0
        %879 = vadd.xlane.f32.xlu0 %v878
        %v880 = vpop.xlane.xlu0 %879
        %v881 = vsel %vm820, %v646, 0.0
        %882 = vadd.xlane.f32.xlu0 %v881
        %v883 = vpop.xlane.xlu0 %882
        %v884 = vsel %vm820, %v649, 0.0
        %885 = vadd.xlane.f32.xlu0 %v884
        %v886 = vpop.xlane.xlu0 %885
        %v887 = vsel %vm820, %v654, 0.0
        %888 = vadd.xlane.f32.xlu0 %v887
        %v889 = vpop.xlane.xlu0 %888
        %v890 = vsel %vm820, %v657, 0.0
        %891 = vadd.xlane.f32.xlu0 %v890
        %v892 = vpop.xlane.xlu0 %891
        %v893 = vsel %vm820, %v662, 0.0
        %894 = vadd.xlane.f32.xlu0 %v893
        %v895 = vpop.xlane.xlu0 %894
        %v896 = vsel %vm820, %v665, 0.0
        %897 = vadd.xlane.f32.xlu0 %v896
        %v898 = vpop.xlane.xlu0 %897
        %v899 = vsel %vm820, %v670, 0.0
        %900 = vadd.xlane.f32.xlu0 %v899
        %v901 = vpop.xlane.xlu0 %900
        %v902 = vsel %vm820, %v673, 0.0
        %903 = vadd.xlane.f32.xlu0 %v902
        %v904 = vpop.xlane.xlu0 %903
        %v905 = vsel %vm820, %v678, 0.0
        %906 = vadd.xlane.f32.xlu0 %v905
        %v907 = vpop.xlane.xlu0 %906
        %v908 = vsel %vm820, %v681, 0.0
        %909 = vadd.xlane.f32.xlu0 %v908
        %v910 = vpop.xlane.xlu0 %909
        %v911 = vsel %vm820, %v686, 0.0
        %912 = vadd.xlane.f32.xlu0 %v911
        %v913 = vpop.xlane.xlu0 %912
        %v914 = vsel %vm820, %v689, 0.0
        %915 = vadd.xlane.f32.xlu0 %v914
        %v916 = vpop.xlane.xlu0 %915
        %v917 = vsel %vm820, %v694, 0.0
        %918 = vadd.xlane.f32.xlu0 %v917
        %v919 = vpop.xlane.xlu0 %918
        %v920 = vsel %vm820, %v697, 0.0
        %921 = vadd.xlane.f32.xlu0 %v920
        %v922 = vpop.xlane.xlu0 %921
        %v923 = vsel %vm820, %v702, 0.0
        %924 = vadd.xlane.f32.xlu0 %v923
        %v925 = vpop.xlane.xlu0 %924
        %v926 = vsel %vm820, %v705, 0.0
        %927 = vadd.xlane.f32.xlu0 %v926
        %v928 = vpop.xlane.xlu0 %927
        %v929 = vsel %vm820, %v710, 0.0
        %930 = vadd.xlane.f32.xlu0 %v929
        %v931 = vpop.xlane.xlu0 %930
        %v932 = vsel %vm820, %v713, 0.0
        %933 = vadd.xlane.f32.xlu0 %v932
        %v934 = vpop.xlane.xlu0 %933
        %v935 = vsel %vm820, %v718, 0.0
        %936 = vadd.xlane.f32.xlu0 %v935
        %v937 = vpop.xlane.xlu0 %936
        %v938 = vsel %vm820, %v721, 0.0
        %939 = vadd.xlane.f32.xlu0 %v938
        %v940 = vpop.xlane.xlu0 %939
        %v941 = vsel %vm820, %v726, 0.0
        %942 = vadd.xlane.f32.xlu0 %v941
        %v943 = vpop.xlane.xlu0 %942
        %v944 = vsel %vm820, %v729, 0.0
        %945 = vadd.xlane.f32.xlu0 %v944
        %v946 = vpop.xlane.xlu0 %945
        %v947 = vsel %vm820, %v734, 0.0
        %948 = vadd.xlane.f32.xlu0 %v947
        %v949 = vpop.xlane.xlu0 %948
        %v950 = vsel %vm820, %v737, 0.0
        %951 = vadd.xlane.f32.xlu0 %v950
        %v952 = vpop.xlane.xlu0 %951
        %v953 = vsel %vm820, %v742, 0.0
        %954 = vadd.xlane.f32.xlu0 %v953
        %v955 = vpop.xlane.xlu0 %954
        %v956 = vsel %vm820, %v745, 0.0
        %957 = vadd.xlane.f32.xlu0 %v956
        %v958 = vpop.xlane.xlu0 %957
        %v959 = vsel %vm820, %v750, 0.0
        %960 = vadd.xlane.f32.xlu0 %v959
        %v961 = vpop.xlane.xlu0 %960
        %v962 = vsel %vm820, %v753, 0.0
        %963 = vadd.xlane.f32.xlu0 %v962
        %v964 = vpop.xlane.xlu0 %963
        %v965 = vsel %vm820, %v758, 0.0
        %966 = vadd.xlane.f32.xlu0 %v965
        %v967 = vpop.xlane.xlu0 %966
        %v968 = vsel %vm820, %v761, 0.0
        %969 = vadd.xlane.f32.xlu0 %v968
        %v970 = vpop.xlane.xlu0 %969
        %v971 = vsel %vm820, %v766, 0.0
        %972 = vadd.xlane.f32.xlu0 %v971
        %v973 = vpop.xlane.xlu0 %972
        %v974 = vsel %vm820, %v769, 0.0
        %975 = vadd.xlane.f32.xlu0 %v974
        %v976 = vpop.xlane.xlu0 %975
        %v977 = vsel %vm820, %v774, 0.0
        %978 = vadd.xlane.f32.xlu0 %v977
        %v979 = vpop.xlane.xlu0 %978
        %v980 = vsel %vm820, %v777, 0.0
        %981 = vadd.xlane.f32.xlu0 %v980
        %v982 = vpop.xlane.xlu0 %981
        %v983 = vsel %vm820, %v782, 0.0
        %984 = vadd.xlane.f32.xlu0 %v983
        %v985 = vpop.xlane.xlu0 %984
        %v986 = vsel %vm820, %v785, 0.0
        %987 = vadd.xlane.f32.xlu0 %v986
        %v988 = vpop.xlane.xlu0 %987
        %v989 = vsel %vm820, %v790, 0.0
        %990 = vadd.xlane.f32.xlu0 %v989
        %v991 = vpop.xlane.xlu0 %990
        %v992 = vsel %vm820, %v793, 0.0
        %993 = vadd.xlane.f32.xlu0 %v992
        %v994 = vpop.xlane.xlu0 %993
        %v995 = vsel %vm820, %v798, 0.0
        %996 = vadd.xlane.f32.xlu0 %v995
        %v997 = vpop.xlane.xlu0 %996
        %v998 = vsel %vm820, %v801, 0.0
        %999 = vadd.xlane.f32.xlu0 %v998
        %v1000 = vpop.xlane.xlu0 %999
        %v1001 = vsel %vm820, %v806, 0.0
        %1002 = vadd.xlane.f32.xlu0 %v1001
        %v1003 = vpop.xlane.xlu0 %1002
        %v1004 = vsel %vm820, %v809, 0.0
        %1005 = vadd.xlane.f32.xlu0 %v1004
        %v1006 = vpop.xlane.xlu0 %1005
        %v1007 = vsel %vm820, %v814, 0.0
        %1008 = vadd.xlane.f32.xlu0 %v1007
        %v1009 = vpop.xlane.xlu0 %1008
        %v1010 = vsel %vm820, %v817, 0.0
        %1011 = vadd.xlane.f32.xlu0 %v1010
        %v1012 = vpop.xlane.xlu0 %1011
        %v1013 = vrcp.pop 32.0
        %v1014 = vmul.f32 %v823, %v1013
        %v1015 = vmul.f32 %v826, %v1013
        %v1016 = vmul.f32 %v829, %v1013
        %v1017 = vmul.f32 %v832, %v1013
        %v1018 = vmul.f32 %v835, %v1013
        %v1019 = vmul.f32 %v838, %v1013
        %v1020 = vmul.f32 %v841, %v1013
        %v1021 = vmul.f32 %v844, %v1013
        %v1022 = vmul.f32 %v847, %v1013
        %v1023 = vmul.f32 %v850, %v1013
        %v1024 = vmul.f32 %v853, %v1013
        %v1025 = vmul.f32 %v856, %v1013
        %v1026 = vmul.f32 %v859, %v1013
        %v1027 = vmul.f32 %v862, %v1013
        %v1028 = vmul.f32 %v865, %v1013
        %v1029 = vmul.f32 %v868, %v1013
        %v1030 = vmul.f32 %v871, %v1013
        %v1031 = vmul.f32 %v874, %v1013
        %v1032 = vmul.f32 %v877, %v1013
        %v1033 = vmul.f32 %v880, %v1013
        %v1034 = vmul.f32 %v883, %v1013
        %v1035 = vmul.f32 %v886, %v1013
        %v1036 = vmul.f32 %v889, %v1013
        %v1037 = vmul.f32 %v892, %v1013
        %v1038 = vmul.f32 %v895, %v1013
        %v1039 = vmul.f32 %v898, %v1013
        %v1040 = vmul.f32 %v901, %v1013
        %v1041 = vmul.f32 %v904, %v1013
        %v1042 = vmul.f32 %v907, %v1013
        %v1043 = vmul.f32 %v910, %v1013
        %v1044 = vmul.f32 %v913, %v1013
        %v1045 = vmul.f32 %v916, %v1013
        %v1046 = vmul.f32 %v919, %v1013
        %v1047 = vmul.f32 %v922, %v1013
        %v1048 = vmul.f32 %v925, %v1013
        %v1049 = vmul.f32 %v928, %v1013
        %v1050 = vmul.f32 %v931, %v1013
        %v1051 = vmul.f32 %v934, %v1013
        %v1052 = vmul.f32 %v937, %v1013
        %v1053 = vmul.f32 %v940, %v1013
        %v1054 = vmul.f32 %v943, %v1013
        %v1055 = vmul.f32 %v946, %v1013
        %v1056 = vmul.f32 %v949, %v1013
        %v1057 = vmul.f32 %v952, %v1013
        %v1058 = vmul.f32 %v955, %v1013
        %v1059 = vmul.f32 %v958, %v1013
        %v1060 = vmul.f32 %v961, %v1013
        %v1061 = vmul.f32 %v964, %v1013
        %v1062 = vmul.f32 %v967, %v1013
        %v1063 = vmul.f32 %v970, %v1013
        %v1064 = vmul.f32 %v973, %v1013
        %v1065 = vmul.f32 %v976, %v1013
        %v1066 = vmul.f32 %v979, %v1013
        %v1067 = vmul.f32 %v982, %v1013
        %v1068 = vmul.f32 %v985, %v1013
        %v1069 = vmul.f32 %v988, %v1013
        %v1070 = vmul.f32 %v991, %v1013
        %v1071 = vmul.f32 %v994, %v1013
        %v1072 = vmul.f32 %v997, %v1013
        %v1073 = vmul.f32 %v1000, %v1013
        %v1074 = vmul.f32 %v1003, %v1013
        %v1075 = vmul.f32 %v1006, %v1013
        %v1076 = vmul.f32 %v1009, %v1013
        %v1077 = vmul.f32 %v1012, %v1013
        %v1078 = vsub.f32 %v566, %v1014
        %v1079 = vsub.f32 %v569, %v1015
        %v1080 = vsub.f32 %v574, %v1016
        %v1081 = vsub.f32 %v577, %v1017
        %v1082 = vsub.f32 %v582, %v1018
        %v1083 = vsub.f32 %v585, %v1019
        %v1084 = vsub.f32 %v590, %v1020
        %v1085 = vsub.f32 %v593, %v1021
        %v1086 = vsub.f32 %v598, %v1022
        %v1087 = vsub.f32 %v601, %v1023
        %v1088 = vsub.f32 %v606, %v1024
        %v1089 = vsub.f32 %v609, %v1025
        %v1090 = vsub.f32 %v614, %v1026
        %v1091 = vsub.f32 %v617, %v1027
        %v1092 = vsub.f32 %v622, %v1028
        %v1093 = vsub.f32 %v625, %v1029
        %v1094 = vsub.f32 %v630, %v1030
        %v1095 = vsub.f32 %v633, %v1031
        %v1096 = vsub.f32 %v638, %v1032
        %v1097 = vsub.f32 %v641, %v1033
        %v1098 = vsub.f32 %v646, %v1034
        %v1099 = vsub.f32 %v649, %v1035
        %v1100 = vsub.f32 %v654, %v1036
        %v1101 = vsub.f32 %v657, %v1037
        %v1102 = vsub.f32 %v662, %v1038
        %v1103 = vsub.f32 %v665, %v1039
        %v1104 = vsub.f32 %v670, %v1040
        %v1105 = vsub.f32 %v673, %v1041
        %v1106 = vsub.f32 %v678, %v1042
        %v1107 = vsub.f32 %v681, %v1043
        %v1108 = vsub.f32 %v686, %v1044
        %v1109 = vsub.f32 %v689, %v1045
        %v1110 = vsub.f32 %v694, %v1046
        %v1111 = vsub.f32 %v697, %v1047
        %v1112 = vsub.f32 %v702, %v1048
        %v1113 = vsub.f32 %v705, %v1049
        %v1114 = vsub.f32 %v710, %v1050
        %v1115 = vsub.f32 %v713, %v1051
        %v1116 = vsub.f32 %v718, %v1052
        %v1117 = vsub.f32 %v721, %v1053
        %v1118 = vsub.f32 %v726, %v1054
        %v1119 = vsub.f32 %v729, %v1055
        %v1120 = vsub.f32 %v734, %v1056
        %v1121 = vsub.f32 %v737, %v1057
        %v1122 = vsub.f32 %v742, %v1058
        %v1123 = vsub.f32 %v745, %v1059
        %v1124 = vsub.f32 %v750, %v1060
        %v1125 = vsub.f32 %v753, %v1061
        %v1126 = vsub.f32 %v758, %v1062
        %v1127 = vsub.f32 %v761, %v1063
        %v1128 = vsub.f32 %v766, %v1064
        %v1129 = vsub.f32 %v769, %v1065
        %v1130 = vsub.f32 %v774, %v1066
        %v1131 = vsub.f32 %v777, %v1067
        %v1132 = vsub.f32 %v782, %v1068
        %v1133 = vsub.f32 %v785, %v1069
        %v1134 = vsub.f32 %v790, %v1070
        %v1135 = vsub.f32 %v793, %v1071
        %v1136 = vsub.f32 %v798, %v1072
        %v1137 = vsub.f32 %v801, %v1073
        %v1138 = vsub.f32 %v806, %v1074
        %v1139 = vsub.f32 %v809, %v1075
        %v1140 = vsub.f32 %v814, %v1076
        %v1141 = vsub.f32 %v817, %v1077
        %v1142 = vmul.f32 %v1078, %v1078
        %v1143 = vmul.f32 %v1079, %v1079
        %v1144 = vmul.f32 %v1080, %v1080
        %v1145 = vmul.f32 %v1081, %v1081
        %v1146 = vmul.f32 %v1082, %v1082
        %v1147 = vmul.f32 %v1083, %v1083
        %v1148 = vmul.f32 %v1084, %v1084
        %v1149 = vmul.f32 %v1085, %v1085
        %v1150 = vmul.f32 %v1086, %v1086
        %v1151 = vmul.f32 %v1087, %v1087
        %v1152 = vmul.f32 %v1088, %v1088
        %v1153 = vmul.f32 %v1089, %v1089
        %v1154 = vmul.f32 %v1090, %v1090
        %v1155 = vmul.f32 %v1091, %v1091
        %v1156 = vmul.f32 %v1092, %v1092
        %v1157 = vmul.f32 %v1093, %v1093
        %v1158 = vmul.f32 %v1094, %v1094
        %v1159 = vmul.f32 %v1095, %v1095
        %v1160 = vmul.f32 %v1096, %v1096
        %v1161 = vmul.f32 %v1097, %v1097
        %v1162 = vmul.f32 %v1098, %v1098
        %v1163 = vmul.f32 %v1099, %v1099
        %v1164 = vmul.f32 %v1100, %v1100
        %v1165 = vmul.f32 %v1101, %v1101
        %v1166 = vmul.f32 %v1102, %v1102
        %v1167 = vmul.f32 %v1103, %v1103
        %v1168 = vmul.f32 %v1104, %v1104
        %v1169 = vmul.f32 %v1105, %v1105
        %v1170 = vmul.f32 %v1106, %v1106
        %v1171 = vmul.f32 %v1107, %v1107
        %v1172 = vmul.f32 %v1108, %v1108
        %v1173 = vmul.f32 %v1109, %v1109
        %v1174 = vmul.f32 %v1110, %v1110
        %v1175 = vmul.f32 %v1111, %v1111
        %v1176 = vmul.f32 %v1112, %v1112
        %v1177 = vmul.f32 %v1113, %v1113
        %v1178 = vmul.f32 %v1114, %v1114
        %v1179 = vmul.f32 %v1115, %v1115
        %v1180 = vmul.f32 %v1116, %v1116
        %v1181 = vmul.f32 %v1117, %v1117
        %v1182 = vmul.f32 %v1118, %v1118
        %v1183 = vmul.f32 %v1119, %v1119
        %v1184 = vmul.f32 %v1120, %v1120
        %v1185 = vmul.f32 %v1121, %v1121
        %v1186 = vmul.f32 %v1122, %v1122
        %v1187 = vmul.f32 %v1123, %v1123
        %v1188 = vmul.f32 %v1124, %v1124
        %v1189 = vmul.f32 %v1125, %v1125
        %v1190 = vmul.f32 %v1126, %v1126
        %v1191 = vmul.f32 %v1127, %v1127
        %v1192 = vmul.f32 %v1128, %v1128
        %v1193 = vmul.f32 %v1129, %v1129
        %v1194 = vmul.f32 %v1130, %v1130
        %v1195 = vmul.f32 %v1131, %v1131
        %v1196 = vmul.f32 %v1132, %v1132
        %v1197 = vmul.f32 %v1133, %v1133
        %v1198 = vmul.f32 %v1134, %v1134
        %v1199 = vmul.f32 %v1135, %v1135
        %v1200 = vmul.f32 %v1136, %v1136
        %v1201 = vmul.f32 %v1137, %v1137
        %v1202 = vmul.f32 %v1138, %v1138
        %v1203 = vmul.f32 %v1139, %v1139
        %v1204 = vmul.f32 %v1140, %v1140
        %v1205 = vmul.f32 %v1141, %v1141
        %v1206 = vsel %vm820, %v1142, 0.0
        %1207 = vadd.xlane.f32.xlu0 %v1206
        %v1208 = vpop.xlane.xlu0 %1207
        %v1209 = vsel %vm820, %v1143, 0.0
        %1210 = vadd.xlane.f32.xlu0 %v1209
        %v1211 = vpop.xlane.xlu0 %1210
        %v1212 = vsel %vm820, %v1144, 0.0
        %1213 = vadd.xlane.f32.xlu0 %v1212
        %v1214 = vpop.xlane.xlu0 %1213
        %v1215 = vsel %vm820, %v1145, 0.0
        %1216 = vadd.xlane.f32.xlu0 %v1215
        %v1217 = vpop.xlane.xlu0 %1216
        %v1218 = vsel %vm820, %v1146, 0.0
        %1219 = vadd.xlane.f32.xlu0 %v1218
        %v1220 = vpop.xlane.xlu0 %1219
        %v1221 = vsel %vm820, %v1147, 0.0
        %1222 = vadd.xlane.f32.xlu0 %v1221
        %v1223 = vpop.xlane.xlu0 %1222
        %v1224 = vsel %vm820, %v1148, 0.0
        %1225 = vadd.xlane.f32.xlu0 %v1224
        %v1226 = vpop.xlane.xlu0 %1225
        %v1227 = vsel %vm820, %v1149, 0.0
        %1228 = vadd.xlane.f32.xlu0 %v1227
        %v1229 = vpop.xlane.xlu0 %1228
        %v1230 = vsel %vm820, %v1150, 0.0
        %1231 = vadd.xlane.f32.xlu0 %v1230
        %v1232 = vpop.xlane.xlu0 %1231
        %v1233 = vsel %vm820, %v1151, 0.0
        %1234 = vadd.xlane.f32.xlu0 %v1233
        %v1235 = vpop.xlane.xlu0 %1234
        %v1236 = vsel %vm820, %v1152, 0.0
        %1237 = vadd.xlane.f32.xlu0 %v1236
        %v1238 = vpop.xlane.xlu0 %1237
        %v1239 = vsel %vm820, %v1153, 0.0
        %1240 = vadd.xlane.f32.xlu0 %v1239
        %v1241 = vpop.xlane.xlu0 %1240
        %v1242 = vsel %vm820, %v1154, 0.0
        %1243 = vadd.xlane.f32.xlu0 %v1242
        %v1244 = vpop.xlane.xlu0 %1243
        %v1245 = vsel %vm820, %v1155, 0.0
        %1246 = vadd.xlane.f32.xlu0 %v1245
        %v1247 = vpop.xlane.xlu0 %1246
        %v1248 = vsel %vm820, %v1156, 0.0
        %1249 = vadd.xlane.f32.xlu0 %v1248
        %v1250 = vpop.xlane.xlu0 %1249
        %v1251 = vsel %vm820, %v1157, 0.0
        %1252 = vadd.xlane.f32.xlu0 %v1251
        %v1253 = vpop.xlane.xlu0 %1252
        %v1254 = vsel %vm820, %v1158, 0.0
        %1255 = vadd.xlane.f32.xlu0 %v1254
        %v1256 = vpop.xlane.xlu0 %1255
        %v1257 = vsel %vm820, %v1159, 0.0
        %1258 = vadd.xlane.f32.xlu0 %v1257
        %v1259 = vpop.xlane.xlu0 %1258
        %v1260 = vsel %vm820, %v1160, 0.0
        %1261 = vadd.xlane.f32.xlu0 %v1260
        %v1262 = vpop.xlane.xlu0 %1261
        %v1263 = vsel %vm820, %v1161, 0.0
        %1264 = vadd.xlane.f32.xlu0 %v1263
        %v1265 = vpop.xlane.xlu0 %1264
        %v1266 = vsel %vm820, %v1162, 0.0
        %1267 = vadd.xlane.f32.xlu0 %v1266
        %v1268 = vpop.xlane.xlu0 %1267
        %v1269 = vsel %vm820, %v1163, 0.0
        %1270 = vadd.xlane.f32.xlu0 %v1269
        %v1271 = vpop.xlane.xlu0 %1270
        %v1272 = vsel %vm820, %v1164, 0.0
        %1273 = vadd.xlane.f32.xlu0 %v1272
        %v1274 = vpop.xlane.xlu0 %1273
        %v1275 = vsel %vm820, %v1165, 0.0
        %1276 = vadd.xlane.f32.xlu0 %v1275
        %v1277 = vpop.xlane.xlu0 %1276
        %v1278 = vsel %vm820, %v1166, 0.0
        %1279 = vadd.xlane.f32.xlu0 %v1278
        %v1280 = vpop.xlane.xlu0 %1279
        %v1281 = vsel %vm820, %v1167, 0.0
        %1282 = vadd.xlane.f32.xlu0 %v1281
        %v1283 = vpop.xlane.xlu0 %1282
        %v1284 = vsel %vm820, %v1168, 0.0
        %1285 = vadd.xlane.f32.xlu0 %v1284
        %v1286 = vpop.xlane.xlu0 %1285
        %v1287 = vsel %vm820, %v1169, 0.0
        %1288 = vadd.xlane.f32.xlu0 %v1287
        %v1289 = vpop.xlane.xlu0 %1288
        %v1290 = vsel %vm820, %v1170, 0.0
        %1291 = vadd.xlane.f32.xlu0 %v1290
        %v1292 = vpop.xlane.xlu0 %1291
        %v1293 = vsel %vm820, %v1171, 0.0
        %1294 = vadd.xlane.f32.xlu0 %v1293
        %v1295 = vpop.xlane.xlu0 %1294
        %v1296 = vsel %vm820, %v1172, 0.0
        %1297 = vadd.xlane.f32.xlu0 %v1296
        %v1298 = vpop.xlane.xlu0 %1297
        %v1299 = vsel %vm820, %v1173, 0.0
        %1300 = vadd.xlane.f32.xlu0 %v1299
        %v1301 = vpop.xlane.xlu0 %1300
        %v1302 = vsel %vm820, %v1174, 0.0
        %1303 = vadd.xlane.f32.xlu0 %v1302
        %v1304 = vpop.xlane.xlu0 %1303
        %v1305 = vsel %vm820, %v1175, 0.0
        %1306 = vadd.xlane.f32.xlu0 %v1305
        %v1307 = vpop.xlane.xlu0 %1306
        %v1308 = vsel %vm820, %v1176, 0.0
        %1309 = vadd.xlane.f32.xlu0 %v1308
        %v1310 = vpop.xlane.xlu0 %1309
        %v1311 = vsel %vm820, %v1177, 0.0
        %1312 = vadd.xlane.f32.xlu0 %v1311
        %v1313 = vpop.xlane.xlu0 %1312
        %v1314 = vsel %vm820, %v1178, 0.0
        %1315 = vadd.xlane.f32.xlu0 %v1314
        %v1316 = vpop.xlane.xlu0 %1315
        %v1317 = vsel %vm820, %v1179, 0.0
        %1318 = vadd.xlane.f32.xlu0 %v1317
        %v1319 = vpop.xlane.xlu0 %1318
        %v1320 = vsel %vm820, %v1180, 0.0
        %1321 = vadd.xlane.f32.xlu0 %v1320
        %v1322 = vpop.xlane.xlu0 %1321
        %v1323 = vsel %vm820, %v1181, 0.0
        %1324 = vadd.xlane.f32.xlu0 %v1323
        %v1325 = vpop.xlane.xlu0 %1324
        %v1326 = vsel %vm820, %v1182, 0.0
        %1327 = vadd.xlane.f32.xlu0 %v1326
        %v1328 = vpop.xlane.xlu0 %1327
        %v1329 = vsel %vm820, %v1183, 0.0
        %1330 = vadd.xlane.f32.xlu0 %v1329
        %v1331 = vpop.xlane.xlu0 %1330
        %v1332 = vsel %vm820, %v1184, 0.0
        %1333 = vadd.xlane.f32.xlu0 %v1332
        %v1334 = vpop.xlane.xlu0 %1333
        %v1335 = vsel %vm820, %v1185, 0.0
        %1336 = vadd.xlane.f32.xlu0 %v1335
        %v1337 = vpop.xlane.xlu0 %1336
        %v1338 = vsel %vm820, %v1186, 0.0
        %1339 = vadd.xlane.f32.xlu0 %v1338
        %v1340 = vpop.xlane.xlu0 %1339
        %v1341 = vsel %vm820, %v1187, 0.0
        %1342 = vadd.xlane.f32.xlu0 %v1341
        %v1343 = vpop.xlane.xlu0 %1342
        %v1344 = vsel %vm820, %v1188, 0.0
        %1345 = vadd.xlane.f32.xlu0 %v1344
        %v1346 = vpop.xlane.xlu0 %1345
        %v1347 = vsel %vm820, %v1189, 0.0
        %1348 = vadd.xlane.f32.xlu0 %v1347
        %v1349 = vpop.xlane.xlu0 %1348
        %v1350 = vsel %vm820, %v1190, 0.0
        %1351 = vadd.xlane.f32.xlu0 %v1350
        %v1352 = vpop.xlane.xlu0 %1351
        %v1353 = vsel %vm820, %v1191, 0.0
        %1354 = vadd.xlane.f32.xlu0 %v1353
        %v1355 = vpop.xlane.xlu0 %1354
        %v1356 = vsel %vm820, %v1192, 0.0
        %1357 = vadd.xlane.f32.xlu0 %v1356
        %v1358 = vpop.xlane.xlu0 %1357
        %v1359 = vsel %vm820, %v1193, 0.0
        %1360 = vadd.xlane.f32.xlu0 %v1359
        %v1361 = vpop.xlane.xlu0 %1360
        %v1362 = vsel %vm820, %v1194, 0.0
        %1363 = vadd.xlane.f32.xlu0 %v1362
        %v1364 = vpop.xlane.xlu0 %1363
        %v1365 = vsel %vm820, %v1195, 0.0
        %1366 = vadd.xlane.f32.xlu0 %v1365
        %v1367 = vpop.xlane.xlu0 %1366
        %v1368 = vsel %vm820, %v1196, 0.0
        %1369 = vadd.xlane.f32.xlu0 %v1368
        %v1370 = vpop.xlane.xlu0 %1369
        %v1371 = vsel %vm820, %v1197, 0.0
        %1372 = vadd.xlane.f32.xlu0 %v1371
        %v1373 = vpop.xlane.xlu0 %1372
        %v1374 = vsel %vm820, %v1198, 0.0
        %1375 = vadd.xlane.f32.xlu0 %v1374
        %v1376 = vpop.xlane.xlu0 %1375
        %v1377 = vsel %vm820, %v1199, 0.0
        %1378 = vadd.xlane.f32.xlu0 %v1377
        %v1379 = vpop.xlane.xlu0 %1378
        %v1380 = vsel %vm820, %v1200, 0.0
        %1381 = vadd.xlane.f32.xlu0 %v1380
        %v1382 = vpop.xlane.xlu0 %1381
        %v1383 = vsel %vm820, %v1201, 0.0
        %1384 = vadd.xlane.f32.xlu0 %v1383
        %v1385 = vpop.xlane.xlu0 %1384
        %v1386 = vsel %vm820, %v1202, 0.0
        %1387 = vadd.xlane.f32.xlu0 %v1386
        %v1388 = vpop.xlane.xlu0 %1387
        %v1389 = vsel %vm820, %v1203, 0.0
        %1390 = vadd.xlane.f32.xlu0 %v1389
        %v1391 = vpop.xlane.xlu0 %1390
        %v1392 = vsel %vm820, %v1204, 0.0
        %1393 = vadd.xlane.f32.xlu0 %v1392
        %v1394 = vpop.xlane.xlu0 %1393
        %v1395 = vsel %vm820, %v1205, 0.0
        %1396 = vadd.xlane.f32.xlu0 %v1395
        %v1397 = vpop.xlane.xlu0 %1396
        %v1398 = vmul.f32 %v1208, %v1013
        %v1399 = vmul.f32 %v1211, %v1013
        %v1400 = vmul.f32 %v1214, %v1013
        %v1401 = vmul.f32 %v1217, %v1013
        %v1402 = vmul.f32 %v1220, %v1013
        %v1403 = vmul.f32 %v1223, %v1013
        %v1404 = vmul.f32 %v1226, %v1013
        %v1405 = vmul.f32 %v1229, %v1013
        %v1406 = vmul.f32 %v1232, %v1013
        %v1407 = vmul.f32 %v1235, %v1013
        %v1408 = vmul.f32 %v1238, %v1013
        %v1409 = vmul.f32 %v1241, %v1013
        %v1410 = vmul.f32 %v1244, %v1013
        %v1411 = vmul.f32 %v1247, %v1013
        %v1412 = vmul.f32 %v1250, %v1013
        %v1413 = vmul.f32 %v1253, %v1013
        %v1414 = vmul.f32 %v1256, %v1013
        %v1415 = vmul.f32 %v1259, %v1013
        %v1416 = vmul.f32 %v1262, %v1013
        %v1417 = vmul.f32 %v1265, %v1013
        %v1418 = vmul.f32 %v1268, %v1013
        %v1419 = vmul.f32 %v1271, %v1013
        %v1420 = vmul.f32 %v1274, %v1013
        %v1421 = vmul.f32 %v1277, %v1013
        %v1422 = vmul.f32 %v1280, %v1013
        %v1423 = vmul.f32 %v1283, %v1013
        %v1424 = vmul.f32 %v1286, %v1013
        %v1425 = vmul.f32 %v1289, %v1013
        %v1426 = vmul.f32 %v1292, %v1013
        %v1427 = vmul.f32 %v1295, %v1013
        %v1428 = vmul.f32 %v1298, %v1013
        %v1429 = vmul.f32 %v1301, %v1013
        %v1430 = vmul.f32 %v1304, %v1013
        %v1431 = vmul.f32 %v1307, %v1013
        %v1432 = vmul.f32 %v1310, %v1013
        %v1433 = vmul.f32 %v1313, %v1013
        %v1434 = vmul.f32 %v1316, %v1013
        %v1435 = vmul.f32 %v1319, %v1013
        %v1436 = vmul.f32 %v1322, %v1013
        %v1437 = vmul.f32 %v1325, %v1013
        %v1438 = vmul.f32 %v1328, %v1013
        %v1439 = vmul.f32 %v1331, %v1013
        %v1440 = vmul.f32 %v1334, %v1013
        %v1441 = vmul.f32 %v1337, %v1013
        %v1442 = vmul.f32 %v1340, %v1013
        %v1443 = vmul.f32 %v1343, %v1013
        %v1444 = vmul.f32 %v1346, %v1013
        %v1445 = vmul.f32 %v1349, %v1013
        %v1446 = vmul.f32 %v1352, %v1013
        %v1447 = vmul.f32 %v1355, %v1013
        %v1448 = vmul.f32 %v1358, %v1013
        %v1449 = vmul.f32 %v1361, %v1013
        %v1450 = vmul.f32 %v1364, %v1013
        %v1451 = vmul.f32 %v1367, %v1013
        %v1452 = vmul.f32 %v1370, %v1013
        %v1453 = vmul.f32 %v1373, %v1013
        %v1454 = vmul.f32 %v1376, %v1013
        %v1455 = vmul.f32 %v1379, %v1013
        %v1456 = vmul.f32 %v1382, %v1013
        %v1457 = vmul.f32 %v1385, %v1013
        %v1458 = vmul.f32 %v1388, %v1013
        %v1459 = vmul.f32 %v1391, %v1013
        %v1460 = vmul.f32 %v1394, %v1013
        %v1461 = vmul.f32 %v1397, %v1013
        %v1462 = vadd.f32 %v1398, 1e-05
        %v1463 = vadd.f32 %v1399, 1e-05
        %v1464 = vadd.f32 %v1400, 1e-05
        %v1465 = vadd.f32 %v1401, 1e-05
        %v1466 = vadd.f32 %v1402, 1e-05
        %v1467 = vadd.f32 %v1403, 1e-05
        %v1468 = vadd.f32 %v1404, 1e-05
        %v1469 = vadd.f32 %v1405, 1e-05
        %v1470 = vadd.f32 %v1406, 1e-05
        %v1471 = vadd.f32 %v1407, 1e-05
        %v1472 = vadd.f32 %v1408, 1e-05
        %v1473 = vadd.f32 %v1409, 1e-05
        %v1474 = vadd.f32 %v1410, 1e-05
        %v1475 = vadd.f32 %v1411, 1e-05
        %v1476 = vadd.f32 %v1412, 1e-05
        %v1477 = vadd.f32 %v1413, 1e-05
        %v1478 = vadd.f32 %v1414, 1e-05
        %v1479 = vadd.f32 %v1415, 1e-05
        %v1480 = vadd.f32 %v1416, 1e-05
        %v1481 = vadd.f32 %v1417, 1e-05
        %v1482 = vadd.f32 %v1418, 1e-05
        %v1483 = vadd.f32 %v1419, 1e-05
        %v1484 = vadd.f32 %v1420, 1e-05
        %v1485 = vadd.f32 %v1421, 1e-05
        %v1486 = vadd.f32 %v1422, 1e-05
        %v1487 = vadd.f32 %v1423, 1e-05
        %v1488 = vadd.f32 %v1424, 1e-05
        %v1489 = vadd.f32 %v1425, 1e-05
        %v1490 = vadd.f32 %v1426, 1e-05
        %v1491 = vadd.f32 %v1427, 1e-05
        %v1492 = vadd.f32 %v1428, 1e-05
        %v1493 = vadd.f32 %v1429, 1e-05
        %v1494 = vadd.f32 %v1430, 1e-05
        %v1495 = vadd.f32 %v1431, 1e-05
        %v1496 = vadd.f32 %v1432, 1e-05
        %v1497 = vadd.f32 %v1433, 1e-05
        %v1498 = vadd.f32 %v1434, 1e-05
        %v1499 = vadd.f32 %v1435, 1e-05
        %v1500 = vadd.f32 %v1436, 1e-05
        %v1501 = vadd.f32 %v1437, 1e-05
        %v1502 = vadd.f32 %v1438, 1e-05
        %v1503 = vadd.f32 %v1439, 1e-05
        %v1504 = vadd.f32 %v1440, 1e-05
        %v1505 = vadd.f32 %v1441, 1e-05
        %v1506 = vadd.f32 %v1442, 1e-05
        %v1507 = vadd.f32 %v1443, 1e-05
        %v1508 = vadd.f32 %v1444, 1e-05
        %v1509 = vadd.f32 %v1445, 1e-05
        %v1510 = vadd.f32 %v1446, 1e-05
        %v1511 = vadd.f32 %v1447, 1e-05
        %v1512 = vadd.f32 %v1448, 1e-05
        %v1513 = vadd.f32 %v1449, 1e-05
        %v1514 = vadd.f32 %v1450, 1e-05
        %v1515 = vadd.f32 %v1451, 1e-05
        %v1516 = vadd.f32 %v1452, 1e-05
        %v1517 = vadd.f32 %v1453, 1e-05
        %v1518 = vadd.f32 %v1454, 1e-05
        %v1519 = vadd.f32 %v1455, 1e-05
        %v1520 = vadd.f32 %v1456, 1e-05
        %v1521 = vadd.f32 %v1457, 1e-05
        %v1522 = vadd.f32 %v1458, 1e-05
        %v1523 = vadd.f32 %v1459, 1e-05
        %v1524 = vadd.f32 %v1460, 1e-05
        %v1525 = vadd.f32 %v1461, 1e-05
        %v1526 = vrsqrt.pop %v1462
        %v1527 = vrsqrt.pop %v1463
        %v1528 = vrsqrt.pop %v1464
        %v1529 = vrsqrt.pop %v1465
        %v1530 = vrsqrt.pop %v1466
        %v1531 = vrsqrt.pop %v1467
        %v1532 = vrsqrt.pop %v1468
        %v1533 = vrsqrt.pop %v1469
        %v1534 = vrsqrt.pop %v1470
        %v1535 = vrsqrt.pop %v1471
        %v1536 = vrsqrt.pop %v1472
        %v1537 = vrsqrt.pop %v1473
        %v1538 = vrsqrt.pop %v1474
        %v1539 = vrsqrt.pop %v1475
        %v1540 = vrsqrt.pop %v1476
        %v1541 = vrsqrt.pop %v1477
        %v1542 = vrsqrt.pop %v1478
        %v1543 = vrsqrt.pop %v1479
        %v1544 = vrsqrt.pop %v1480
        %v1545 = vrsqrt.pop %v1481
        %v1546 = vrsqrt.pop %v1482
        %v1547 = vrsqrt.pop %v1483
        %v1548 = vrsqrt.pop %v1484
        %v1549 = vrsqrt.pop %v1485
        %v1550 = vrsqrt.pop %v1486
        %v1551 = vrsqrt.pop %v1487
        %v1552 = vrsqrt.pop %v1488
        %v1553 = vrsqrt.pop %v1489
        %v1554 = vrsqrt.pop %v1490
        %v1555 = vrsqrt.pop %v1491
        %v1556 = vrsqrt.pop %v1492
        %v1557 = vrsqrt.pop %v1493
        %v1558 = vrsqrt.pop %v1494
        %v1559 = vrsqrt.pop %v1495
        %v1560 = vrsqrt.pop %v1496
        %v1561 = vrsqrt.pop %v1497
        %v1562 = vrsqrt.pop %v1498
        %v1563 = vrsqrt.pop %v1499
        %v1564 = vrsqrt.pop %v1500
        %v1565 = vrsqrt.pop %v1501
        %v1566 = vrsqrt.pop %v1502
        %v1567 = vrsqrt.pop %v1503
        %v1568 = vrsqrt.pop %v1504
        %v1569 = vrsqrt.pop %v1505
        %v1570 = vrsqrt.pop %v1506
        %v1571 = vrsqrt.pop %v1507
        %v1572 = vrsqrt.pop %v1508
        %v1573 = vrsqrt.pop %v1509
        %v1574 = vrsqrt.pop %v1510
        %v1575 = vrsqrt.pop %v1511
        %v1576 = vrsqrt.pop %v1512
        %v1577 = vrsqrt.pop %v1513
        %v1578 = vrsqrt.pop %v1514
        %v1579 = vrsqrt.pop %v1515
        %v1580 = vrsqrt.pop %v1516
        %v1581 = vrsqrt.pop %v1517
        %v1582 = vrsqrt.pop %v1518
        %v1583 = vrsqrt.pop %v1519
        %v1584 = vrsqrt.pop %v1520
        %v1585 = vrsqrt.pop %v1521
        %v1586 = vrsqrt.pop %v1522
        %v1587 = vrsqrt.pop %v1523
        %v1588 = vrsqrt.pop %v1524
        %v1589 = vrsqrt.pop %v1525
        %v1590 = vmul.f32 %v1078, %v1526
        %v1591 = vmul.f32 %v1079, %v1527
        %v1592 = vmul.f32 %v1080, %v1528
        %v1593 = vmul.f32 %v1081, %v1529
        %v1594 = vmul.f32 %v1082, %v1530
        %v1595 = vmul.f32 %v1083, %v1531
        %v1596 = vmul.f32 %v1084, %v1532
        %v1597 = vmul.f32 %v1085, %v1533
        %v1598 = vmul.f32 %v1086, %v1534
        %v1599 = vmul.f32 %v1087, %v1535
        %v1600 = vmul.f32 %v1088, %v1536
        %v1601 = vmul.f32 %v1089, %v1537
        %v1602 = vmul.f32 %v1090, %v1538
        %v1603 = vmul.f32 %v1091, %v1539
        %v1604 = vmul.f32 %v1092, %v1540
        %v1605 = vmul.f32 %v1093, %v1541
        %v1606 = vmul.f32 %v1094, %v1542
        %v1607 = vmul.f32 %v1095, %v1543
        %v1608 = vmul.f32 %v1096, %v1544
        %v1609 = vmul.f32 %v1097, %v1545
        %v1610 = vmul.f32 %v1098, %v1546
        %v1611 = vmul.f32 %v1099, %v1547
        %v1612 = vmul.f32 %v1100, %v1548
        %v1613 = vmul.f32 %v1101, %v1549
        %v1614 = vmul.f32 %v1102, %v1550
        %v1615 = vmul.f32 %v1103, %v1551
        %v1616 = vmul.f32 %v1104, %v1552
        %v1617 = vmul.f32 %v1105, %v1553
        %v1618 = vmul.f32 %v1106, %v1554
        %v1619 = vmul.f32 %v1107, %v1555
        %v1620 = vmul.f32 %v1108, %v1556
        %v1621 = vmul.f32 %v1109, %v1557
        %v1622 = vmul.f32 %v1110, %v1558
        %v1623 = vmul.f32 %v1111, %v1559
        %v1624 = vmul.f32 %v1112, %v1560
        %v1625 = vmul.f32 %v1113, %v1561
        %v1626 = vmul.f32 %v1114, %v1562
        %v1627 = vmul.f32 %v1115, %v1563
        %v1628 = vmul.f32 %v1116, %v1564
        %v1629 = vmul.f32 %v1117, %v1565
        %v1630 = vmul.f32 %v1118, %v1566
        %v1631 = vmul.f32 %v1119, %v1567
        %v1632 = vmul.f32 %v1120, %v1568
        %v1633 = vmul.f32 %v1121, %v1569
        %v1634 = vmul.f32 %v1122, %v1570
        %v1635 = vmul.f32 %v1123, %v1571
        %v1636 = vmul.f32 %v1124, %v1572
        %v1637 = vmul.f32 %v1125, %v1573
        %v1638 = vmul.f32 %v1126, %v1574
        %v1639 = vmul.f32 %v1127, %v1575
        %v1640 = vmul.f32 %v1128, %v1576
        %v1641 = vmul.f32 %v1129, %v1577
        %v1642 = vmul.f32 %v1130, %v1578
        %v1643 = vmul.f32 %v1131, %v1579
        %v1644 = vmul.f32 %v1132, %v1580
        %v1645 = vmul.f32 %v1133, %v1581
        %v1646 = vmul.f32 %v1134, %v1582
        %v1647 = vmul.f32 %v1135, %v1583
        %v1648 = vmul.f32 %v1136, %v1584
        %v1649 = vmul.f32 %v1137, %v1585
        %v1650 = vmul.f32 %v1138, %v1586
        %v1651 = vmul.f32 %v1139, %v1587
        %v1652 = vmul.f32 %v1140, %v1588
        %v1653 = vmul.f32 %v1141, %v1589
        %v1654 = vld [vmem:[%s310] sm:$0x1]
        %v1656 = vlaneseq
        %v1657 = vshrl.u32 %v1656, 7
        %v1658 = vsub.s32 0, %v1657
        %v1659 = vrot.slane %v1654, %v1658
        %v1661 = vmul.f32 %v1590, %v1659
        %v1662 = vmul.f32 %v1591, %v1659
        %v1663 = vmul.f32 %v1592, %v1659
        %v1664 = vmul.f32 %v1593, %v1659
        %v1665 = vmul.f32 %v1594, %v1659
        %v1666 = vmul.f32 %v1595, %v1659
        %v1667 = vmul.f32 %v1596, %v1659
        %v1668 = vmul.f32 %v1597, %v1659
        %v1669 = vmul.f32 %v1598, %v1659
        %v1670 = vmul.f32 %v1599, %v1659
        %v1671 = vmul.f32 %v1600, %v1659
        %v1672 = vmul.f32 %v1601, %v1659
        %v1673 = vmul.f32 %v1602, %v1659
        %v1674 = vmul.f32 %v1603, %v1659
        %v1675 = vmul.f32 %v1604, %v1659
        %v1676 = vmul.f32 %v1605, %v1659
        %v1677 = vmul.f32 %v1606, %v1659
        %v1678 = vmul.f32 %v1607, %v1659
        %v1679 = vmul.f32 %v1608, %v1659
        %v1680 = vmul.f32 %v1609, %v1659
        %v1681 = vmul.f32 %v1610, %v1659
        %v1682 = vmul.f32 %v1611, %v1659
        %v1683 = vmul.f32 %v1612, %v1659
        %v1684 = vmul.f32 %v1613, %v1659
        %v1685 = vmul.f32 %v1614, %v1659
        %v1686 = vmul.f32 %v1615, %v1659
        %v1687 = vmul.f32 %v1616, %v1659
        %v1688 = vmul.f32 %v1617, %v1659
        %v1689 = vmul.f32 %v1618, %v1659
        %v1690 = vmul.f32 %v1619, %v1659
        %v1691 = vmul.f32 %v1620, %v1659
        %v1692 = vmul.f32 %v1621, %v1659
        %v1693 = vmul.f32 %v1622, %v1659
        %v1694 = vmul.f32 %v1623, %v1659
        %v1695 = vmul.f32 %v1624, %v1659
        %v1696 = vmul.f32 %v1625, %v1659
        %v1697 = vmul.f32 %v1626, %v1659
        %v1698 = vmul.f32 %v1627, %v1659
        %v1699 = vmul.f32 %v1628, %v1659
        %v1700 = vmul.f32 %v1629, %v1659
        %v1701 = vmul.f32 %v1630, %v1659
        %v1702 = vmul.f32 %v1631, %v1659
        %v1703 = vmul.f32 %v1632, %v1659
        %v1704 = vmul.f32 %v1633, %v1659
        %v1705 = vmul.f32 %v1634, %v1659
        %v1706 = vmul.f32 %v1635, %v1659
        %v1707 = vmul.f32 %v1636, %v1659
        %v1708 = vmul.f32 %v1637, %v1659
        %v1709 = vmul.f32 %v1638, %v1659
        %v1710 = vmul.f32 %v1639, %v1659
        %v1711 = vmul.f32 %v1640, %v1659
        %v1712 = vmul.f32 %v1641, %v1659
        %v1713 = vmul.f32 %v1642, %v1659
        %v1714 = vmul.f32 %v1643, %v1659
        %v1715 = vmul.f32 %v1644, %v1659
        %v1716 = vmul.f32 %v1645, %v1659
        %v1717 = vmul.f32 %v1646, %v1659
        %v1718 = vmul.f32 %v1647, %v1659
        %v1719 = vmul.f32 %v1648, %v1659
        %v1720 = vmul.f32 %v1649, %v1659
        %v1721 = vmul.f32 %v1650, %v1659
        %v1722 = vmul.f32 %v1651, %v1659
        %v1723 = vmul.f32 %v1652, %v1659
        %v1724 = vmul.f32 %v1653, %v1659
        %v1725 = vld [vmem:[%s313] sm:$0x1]
        %v1727 = vlaneseq
        %v1728 = vshrl.u32 %v1727, 7
        %v1729 = vsub.s32 0, %v1728
        %v1730 = vrot.slane %v1725, %v1729
        %v1732 = vadd.f32 %v1661, %v1730
        %v1733 = vadd.f32 %v1662, %v1730
        %v1734 = vadd.f32 %v1663, %v1730
        %v1735 = vadd.f32 %v1664, %v1730
        %v1736 = vadd.f32 %v1665, %v1730
        %v1737 = vadd.f32 %v1666, %v1730
        %v1738 = vadd.f32 %v1667, %v1730
        %v1739 = vadd.f32 %v1668, %v1730
        %v1740 = vadd.f32 %v1669, %v1730
        %v1741 = vadd.f32 %v1670, %v1730
        %v1742 = vadd.f32 %v1671, %v1730
        %v1743 = vadd.f32 %v1672, %v1730
        %v1744 = vadd.f32 %v1673, %v1730
        %v1745 = vadd.f32 %v1674, %v1730
        %v1746 = vadd.f32 %v1675, %v1730
        %v1747 = vadd.f32 %v1676, %v1730
        %v1748 = vadd.f32 %v1677, %v1730
        %v1749 = vadd.f32 %v1678, %v1730
        %v1750 = vadd.f32 %v1679, %v1730
        %v1751 = vadd.f32 %v1680, %v1730
        %v1752 = vadd.f32 %v1681, %v1730
        %v1753 = vadd.f32 %v1682, %v1730
        %v1754 = vadd.f32 %v1683, %v1730
        %v1755 = vadd.f32 %v1684, %v1730
        %v1756 = vadd.f32 %v1685, %v1730
        %v1757 = vadd.f32 %v1686, %v1730
        %v1758 = vadd.f32 %v1687, %v1730
        %v1759 = vadd.f32 %v1688, %v1730
        %v1760 = vadd.f32 %v1689, %v1730
        %v1761 = vadd.f32 %v1690, %v1730
        %v1762 = vadd.f32 %v1691, %v1730
        %v1763 = vadd.f32 %v1692, %v1730
        %v1764 = vadd.f32 %v1693, %v1730
        %v1765 = vadd.f32 %v1694, %v1730
        %v1766 = vadd.f32 %v1695, %v1730
        %v1767 = vadd.f32 %v1696, %v1730
        %v1768 = vadd.f32 %v1697, %v1730
        %v1769 = vadd.f32 %v1698, %v1730
        %v1770 = vadd.f32 %v1699, %v1730
        %v1771 = vadd.f32 %v1700, %v1730
        %v1772 = vadd.f32 %v1701, %v1730
        %v1773 = vadd.f32 %v1702, %v1730
        %v1774 = vadd.f32 %v1703, %v1730
        %v1775 = vadd.f32 %v1704, %v1730
        %v1776 = vadd.f32 %v1705, %v1730
        %v1777 = vadd.f32 %v1706, %v1730
        %v1778 = vadd.f32 %v1707, %v1730
        %v1779 = vadd.f32 %v1708, %v1730
        %v1780 = vadd.f32 %v1709, %v1730
        %v1781 = vadd.f32 %v1710, %v1730
        %v1782 = vadd.f32 %v1711, %v1730
        %v1783 = vadd.f32 %v1712, %v1730
        %v1784 = vadd.f32 %v1713, %v1730
        %v1785 = vadd.f32 %v1714, %v1730
        %v1786 = vadd.f32 %v1715, %v1730
        %v1787 = vadd.f32 %v1716, %v1730
        %v1788 = vadd.f32 %v1717, %v1730
        %v1789 = vadd.f32 %v1718, %v1730
        %v1790 = vadd.f32 %v1719, %v1730
        %v1791 = vadd.f32 %v1720, %v1730
        %v1792 = vadd.f32 %v1721, %v1730
        %v1793 = vadd.f32 %v1722, %v1730
        %v1794 = vadd.f32 %v1723, %v1730
        %v1795 = vadd.f32 %v1724, %v1730
        %v1796 = vmul.f32 %v1732, 0.5
        %v1797 = vmul.f32 %v1733, 0.5
        %v1798 = vmul.f32 %v1734, 0.5
        %v1799 = vmul.f32 %v1735, 0.5
        %v1800 = vmul.f32 %v1736, 0.5
        %v1801 = vmul.f32 %v1737, 0.5
        %v1802 = vmul.f32 %v1738, 0.5
        %v1803 = vmul.f32 %v1739, 0.5
        %v1804 = vmul.f32 %v1740, 0.5
        %v1805 = vmul.f32 %v1741, 0.5
        %v1806 = vmul.f32 %v1742, 0.5
        %v1807 = vmul.f32 %v1743, 0.5
        %v1808 = vmul.f32 %v1744, 0.5
        %v1809 = vmul.f32 %v1745, 0.5
        %v1810 = vmul.f32 %v1746, 0.5
        %v1811 = vmul.f32 %v1747, 0.5
        %v1812 = vmul.f32 %v1748, 0.5
        %v1813 = vmul.f32 %v1749, 0.5
        %v1814 = vmul.f32 %v1750, 0.5
        %v1815 = vmul.f32 %v1751, 0.5
        %v1816 = vmul.f32 %v1752, 0.5
        %v1817 = vmul.f32 %v1753, 0.5
        %v1818 = vmul.f32 %v1754, 0.5
        %v1819 = vmul.f32 %v1755, 0.5
        %v1820 = vmul.f32 %v1756, 0.5
        %v1821 = vmul.f32 %v1757, 0.5
        %v1822 = vmul.f32 %v1758, 0.5
        %v1823 = vmul.f32 %v1759, 0.5
        %v1824 = vmul.f32 %v1760, 0.5
        %v1825 = vmul.f32 %v1761, 0.5
        %v1826 = vmul.f32 %v1762, 0.5
        %v1827 = vmul.f32 %v1763, 0.5
        %v1828 = vmul.f32 %v1764, 0.5
        %v1829 = vmul.f32 %v1765, 0.5
        %v1830 = vmul.f32 %v1766, 0.5
        %v1831 = vmul.f32 %v1767, 0.5
        %v1832 = vmul.f32 %v1768, 0.5
        %v1833 = vmul.f32 %v1769, 0.5
        %v1834 = vmul.f32 %v1770, 0.5
        %v1835 = vmul.f32 %v1771, 0.5
        %v1836 = vmul.f32 %v1772, 0.5
        %v1837 = vmul.f32 %v1773, 0.5
        %v1838 = vmul.f32 %v1774, 0.5
        %v1839 = vmul.f32 %v1775, 0.5
        %v1840 = vmul.f32 %v1776, 0.5
        %v1841 = vmul.f32 %v1777, 0.5
        %v1842 = vmul.f32 %v1778, 0.5
        %v1843 = vmul.f32 %v1779, 0.5
        %v1844 = vmul.f32 %v1780, 0.5
        %v1845 = vmul.f32 %v1781, 0.5
        %v1846 = vmul.f32 %v1782, 0.5
        %v1847 = vmul.f32 %v1783, 0.5
        %v1848 = vmul.f32 %v1784, 0.5
        %v1849 = vmul.f32 %v1785, 0.5
        %v1850 = vmul.f32 %v1786, 0.5
        %v1851 = vmul.f32 %v1787, 0.5
        %v1852 = vmul.f32 %v1788, 0.5
        %v1853 = vmul.f32 %v1789, 0.5
        %v1854 = vmul.f32 %v1790, 0.5
        %v1855 = vmul.f32 %v1791, 0.5
        %v1856 = vmul.f32 %v1792, 0.5
        %v1857 = vmul.f32 %v1793, 0.5
        %v1858 = vmul.f32 %v1794, 0.5
        %v1859 = vmul.f32 %v1795, 0.5
        %v1860 = vmul.f32 %v1732, 0.70710677
        %v1861 = vmul.f32 %v1733, 0.70710677
        %v1862 = vmul.f32 %v1734, 0.70710677
        %v1863 = vmul.f32 %v1735, 0.70710677
        %v1864 = vmul.f32 %v1736, 0.70710677
        %v1865 = vmul.f32 %v1737, 0.70710677
        %v1866 = vmul.f32 %v1738, 0.70710677
        %v1867 = vmul.f32 %v1739, 0.70710677
        %v1868 = vmul.f32 %v1740, 0.70710677
        %v1869 = vmul.f32 %v1741, 0.70710677
        %v1870 = vmul.f32 %v1742, 0.70710677
        %v1871 = vmul.f32 %v1743, 0.70710677
        %v1872 = vmul.f32 %v1744, 0.70710677
        %v1873 = vmul.f32 %v1745, 0.70710677
        %v1874 = vmul.f32 %v1746, 0.70710677
        %v1875 = vmul.f32 %v1747, 0.70710677
        %v1876 = vmul.f32 %v1748, 0.70710677
        %v1877 = vmul.f32 %v1749, 0.70710677
        %v1878 = vmul.f32 %v1750, 0.70710677
        %v1879 = vmul.f32 %v1751, 0.70710677
        %v1880 = vmul.f32 %v1752, 0.70710677
        %v1881 = vmul.f32 %v1753, 0.70710677
        %v1882 = vmul.f32 %v1754, 0.70710677
        %v1883 = vmul.f32 %v1755, 0.70710677
        %v1884 = vmul.f32 %v1756, 0.70710677
        %v1885 = vmul.f32 %v1757, 0.70710677
        %v1886 = vmul.f32 %v1758, 0.70710677
        %v1887 = vmul.f32 %v1759, 0.70710677
        %v1888 = vmul.f32 %v1760, 0.70710677
        %v1889 = vmul.f32 %v1761, 0.70710677
        %v1890 = vmul.f32 %v1762, 0.70710677
        %v1891 = vmul.f32 %v1763, 0.70710677
        %v1892 = vmul.f32 %v1764, 0.70710677
        %v1893 = vmul.f32 %v1765, 0.70710677
        %v1894 = vmul.f32 %v1766, 0.70710677
        %v1895 = vmul.f32 %v1767, 0.70710677
        %v1896 = vmul.f32 %v1768, 0.70710677
        %v1897 = vmul.f32 %v1769, 0.70710677
        %v1898 = vmul.f32 %v1770, 0.70710677
        %v1899 = vmul.f32 %v1771, 0.70710677
        %v1900 = vmul.f32 %v1772, 0.70710677
        %v1901 = vmul.f32 %v1773, 0.70710677
        %v1902 = vmul.f32 %v1774, 0.70710677
        %v1903 = vmul.f32 %v1775, 0.70710677
        %v1904 = vmul.f32 %v1776, 0.70710677
        %v1905 = vmul.f32 %v1777, 0.70710677
        %v1906 = vmul.f32 %v1778, 0.70710677
        %v1907 = vmul.f32 %v1779, 0.70710677
        %v1908 = vmul.f32 %v1780, 0.70710677
        %v1909 = vmul.f32 %v1781, 0.70710677
        %v1910 = vmul.f32 %v1782, 0.70710677
        %v1911 = vmul.f32 %v1783, 0.70710677
        %v1912 = vmul.f32 %v1784, 0.70710677
        %v1913 = vmul.f32 %v1785, 0.70710677
        %v1914 = vmul.f32 %v1786, 0.70710677
        %v1915 = vmul.f32 %v1787, 0.70710677
        %v1916 = vmul.f32 %v1788, 0.70710677
        %v1917 = vmul.f32 %v1789, 0.70710677
        %v1918 = vmul.f32 %v1790, 0.70710677
        %v1919 = vmul.f32 %v1791, 0.70710677
        %v1920 = vmul.f32 %v1792, 0.70710677
        %v1921 = vmul.f32 %v1793, 0.70710677
        %v1922 = vmul.f32 %v1794, 0.70710677
        %v1923 = vmul.f32 %v1795, 0.70710677
        %v1924 = verf.f32.pop %v1860
        %v1925 = verf.f32.pop %v1861
        %v1926 = verf.f32.pop %v1862
        %v1927 = verf.f32.pop %v1863
        %v1928 = verf.f32.pop %v1864
        %v1929 = verf.f32.pop %v1865
        %v1930 = verf.f32.pop %v1866
        %v1931 = verf.f32.pop %v1867
        %v1932 = verf.f32.pop %v1868
        %v1933 = verf.f32.pop %v1869
        %v1934 = verf.f32.pop %v1870
        %v1935 = verf.f32.pop %v1871
        %v1936 = verf.f32.pop %v1872
        %v1937 = verf.f32.pop %v1873
        %v1938 = verf.f32.pop %v1874
        %v1939 = verf.f32.pop %v1875
        %v1940 = verf.f32.pop %v1876
        %v1941 = verf.f32.pop %v1877
        %v1942 = verf.f32.pop %v1878
        %v1943 = verf.f32.pop %v1879
        %v1944 = verf.f32.pop %v1880
        %v1945 = verf.f32.pop %v1881
        %v1946 = verf.f32.pop %v1882
        %v1947 = verf.f32.pop %v1883
        %v1948 = verf.f32.pop %v1884
        %v1949 = verf.f32.pop %v1885
        %v1950 = verf.f32.pop %v1886
        %v1951 = verf.f32.pop %v1887
        %v1952 = verf.f32.pop %v1888
        %v1953 = verf.f32.pop %v1889
        %v1954 = verf.f32.pop %v1890
        %v1955 = verf.f32.pop %v1891
        %v1956 = verf.f32.pop %v1892
        %v1957 = verf.f32.pop %v1893
        %v1958 = verf.f32.pop %v1894
        %v1959 = verf.f32.pop %v1895
        %v1960 = verf.f32.pop %v1896
        %v1961 = verf.f32.pop %v1897
        %v1962 = verf.f32.pop %v1898
        %v1963 = verf.f32.pop %v1899
        %v1964 = verf.f32.pop %v1900
        %v1965 = verf.f32.pop %v1901
        %v1966 = verf.f32.pop %v1902
        %v1967 = verf.f32.pop %v1903
        %v1968 = verf.f32.pop %v1904
        %v1969 = verf.f32.pop %v1905
        %v1970 = verf.f32.pop %v1906
        %v1971 = verf.f32.pop %v1907
        %v1972 = verf.f32.pop %v1908
        %v1973 = verf.f32.pop %v1909
        %v1974 = verf.f32.pop %v1910
        %v1975 = verf.f32.pop %v1911
        %v1976 = verf.f32.pop %v1912
        %v1977 = verf.f32.pop %v1913
        %v1978 = verf.f32.pop %v1914
        %v1979 = verf.f32.pop %v1915
        %v1980 = verf.f32.pop %v1916
        %v1981 = verf.f32.pop %v1917
        %v1982 = verf.f32.pop %v1918
        %v1983 = verf.f32.pop %v1919
        %v1984 = verf.f32.pop %v1920
        %v1985 = verf.f32.pop %v1921
        %v1986 = verf.f32.pop %v1922
        %v1987 = verf.f32.pop %v1923
        %v1988 = vadd.f32 %v1924, 1.0
        %v1989 = vadd.f32 %v1925, 1.0
        %v1990 = vadd.f32 %v1926, 1.0
        %v1991 = vadd.f32 %v1927, 1.0
        %v1992 = vadd.f32 %v1928, 1.0
        %v1993 = vadd.f32 %v1929, 1.0
        %v1994 = vadd.f32 %v1930, 1.0
        %v1995 = vadd.f32 %v1931, 1.0
        %v1996 = vadd.f32 %v1932, 1.0
        %v1997 = vadd.f32 %v1933, 1.0
        %v1998 = vadd.f32 %v1934, 1.0
        %v1999 = vadd.f32 %v1935, 1.0
        %v2000 = vadd.f32 %v1936, 1.0
        %v2001 = vadd.f32 %v1937, 1.0
        %v2002 = vadd.f32 %v1938, 1.0
        %v2003 = vadd.f32 %v1939, 1.0
        %v2004 = vadd.f32 %v1940, 1.0
        %v2005 = vadd.f32 %v1941, 1.0
        %v2006 = vadd.f32 %v1942, 1.0
        %v2007 = vadd.f32 %v1943, 1.0
        %v2008 = vadd.f32 %v1944, 1.0
        %v2009 = vadd.f32 %v1945, 1.0
        %v2010 = vadd.f32 %v1946, 1.0
        %v2011 = vadd.f32 %v1947, 1.0
        %v2012 = vadd.f32 %v1948, 1.0
        %v2013 = vadd.f32 %v1949, 1.0
        %v2014 = vadd.f32 %v1950, 1.0
        %v2015 = vadd.f32 %v1951, 1.0
        %v2016 = vadd.f32 %v1952, 1.0
        %v2017 = vadd.f32 %v1953, 1.0
        %v2018 = vadd.f32 %v1954, 1.0
        %v2019 = vadd.f32 %v1955, 1.0
        %v2020 = vadd.f32 %v1956, 1.0
        %v2021 = vadd.f32 %v1957, 1.0
        %v2022 = vadd.f32 %v1958, 1.0
        %v2023 = vadd.f32 %v1959, 1.0
        %v2024 = vadd.f32 %v1960, 1.0
        %v2025 = vadd.f32 %v1961, 1.0
        %v2026 = vadd.f32 %v1962, 1.0
        %v2027 = vadd.f32 %v1963, 1.0
        %v2028 = vadd.f32 %v1964, 1.0
        %v2029 = vadd.f32 %v1965, 1.0
        %v2030 = vadd.f32 %v1966, 1.0
        %v2031 = vadd.f32 %v1967, 1.0
        %v2032 = vadd.f32 %v1968, 1.0
        %v2033 = vadd.f32 %v1969, 1.0
        %v2034 = vadd.f32 %v1970, 1.0
        %v2035 = vadd.f32 %v1971, 1.0
        %v2036 = vadd.f32 %v1972, 1.0
        %v2037 = vadd.f32 %v1973, 1.0
        %v2038 = vadd.f32 %v1974, 1.0
        %v2039 = vadd.f32 %v1975, 1.0
        %v2040 = vadd.f32 %v1976, 1.0
        %v2041 = vadd.f32 %v1977, 1.0
        %v2042 = vadd.f32 %v1978, 1.0
        %v2043 = vadd.f32 %v1979, 1.0
        %v2044 = vadd.f32 %v1980, 1.0
        %v2045 = vadd.f32 %v1981, 1.0
        %v2046 = vadd.f32 %v1982, 1.0
        %v2047 = vadd.f32 %v1983, 1.0
        %v2048 = vadd.f32 %v1984, 1.0
        %v2049 = vadd.f32 %v1985, 1.0
        %v2050 = vadd.f32 %v1986, 1.0
        %v2051 = vadd.f32 %v1987, 1.0
        %v2052 = vmul.f32 %v1796, %v1988
        %v2053 = vmul.f32 %v1797, %v1989
        %v2054 = vmul.f32 %v1798, %v1990
        %v2055 = vmul.f32 %v1799, %v1991
        %v2056 = vmul.f32 %v1800, %v1992
        %v2057 = vmul.f32 %v1801, %v1993
        %v2058 = vmul.f32 %v1802, %v1994
        %v2059 = vmul.f32 %v1803, %v1995
        %v2060 = vmul.f32 %v1804, %v1996
        %v2061 = vmul.f32 %v1805, %v1997
        %v2062 = vmul.f32 %v1806, %v1998
        %v2063 = vmul.f32 %v1807, %v1999
        %v2064 = vmul.f32 %v1808, %v2000
        %v2065 = vmul.f32 %v1809, %v2001
        %v2066 = vmul.f32 %v1810, %v2002
        %v2067 = vmul.f32 %v1811, %v2003
        %v2068 = vmul.f32 %v1812, %v2004
        %v2069 = vmul.f32 %v1813, %v2005
        %v2070 = vmul.f32 %v1814, %v2006
        %v2071 = vmul.f32 %v1815, %v2007
        %v2072 = vmul.f32 %v1816, %v2008
        %v2073 = vmul.f32 %v1817, %v2009
        %v2074 = vmul.f32 %v1818, %v2010
        %v2075 = vmul.f32 %v1819, %v2011
        %v2076 = vmul.f32 %v1820, %v2012
        %v2077 = vmul.f32 %v1821, %v2013
        %v2078 = vmul.f32 %v1822, %v2014
        %v2079 = vmul.f32 %v1823, %v2015
        %v2080 = vmul.f32 %v1824, %v2016
        %v2081 = vmul.f32 %v1825, %v2017
        %v2082 = vmul.f32 %v1826, %v2018
        %v2083 = vmul.f32 %v1827, %v2019
        %v2084 = vmul.f32 %v1828, %v2020
        %v2085 = vmul.f32 %v1829, %v2021
        %v2086 = vmul.f32 %v1830, %v2022
        %v2087 = vmul.f32 %v1831, %v2023
        %v2088 = vmul.f32 %v1832, %v2024
        %v2089 = vmul.f32 %v1833, %v2025
        %v2090 = vmul.f32 %v1834, %v2026
        %v2091 = vmul.f32 %v1835, %v2027
        %v2092 = vmul.f32 %v1836, %v2028
        %v2093 = vmul.f32 %v1837, %v2029
        %v2094 = vmul.f32 %v1838, %v2030
        %v2095 = vmul.f32 %v1839, %v2031
        %v2096 = vmul.f32 %v1840, %v2032
        %v2097 = vmul.f32 %v1841, %v2033
        %v2098 = vmul.f32 %v1842, %v2034
        %v2099 = vmul.f32 %v1843, %v2035
        %v2100 = vmul.f32 %v1844, %v2036
        %v2101 = vmul.f32 %v1845, %v2037
        %v2102 = vmul.f32 %v1846, %v2038
        %v2103 = vmul.f32 %v1847, %v2039
        %v2104 = vmul.f32 %v1848, %v2040
        %v2105 = vmul.f32 %v1849, %v2041
        %v2106 = vmul.f32 %v1850, %v2042
        %v2107 = vmul.f32 %v1851, %v2043
        %v2108 = vmul.f32 %v1852, %v2044
        %v2109 = vmul.f32 %v1853, %v2045
        %v2110 = vmul.f32 %v1854, %v2046
        %v2111 = vmul.f32 %v1855, %v2047
        %v2112 = vmul.f32 %v1856, %v2048
        %v2113 = vmul.f32 %v1857, %v2049
        %v2114 = vmul.f32 %v1858, %v2050
        %v2115 = vmul.f32 %v1859, %v2051
        %v2116 = vpack.c.bf16 %v2053, %v2052
        %v2117 = vpack.c.bf16 %v2055, %v2054
        %v2118 = vpack.c.bf16 %v2057, %v2056
        %v2119 = vpack.c.bf16 %v2059, %v2058
        %v2120 = vpack.c.bf16 %v2061, %v2060
        %v2121 = vpack.c.bf16 %v2063, %v2062
        %v2122 = vpack.c.bf16 %v2065, %v2064
        %v2123 = vpack.c.bf16 %v2067, %v2066
        %v2124 = vpack.c.bf16 %v2069, %v2068
        %v2125 = vpack.c.bf16 %v2071, %v2070
        %v2126 = vpack.c.bf16 %v2073, %v2072
        %v2127 = vpack.c.bf16 %v2075, %v2074
        %v2128 = vpack.c.bf16 %v2077, %v2076
        %v2129 = vpack.c.bf16 %v2079, %v2078
        %v2130 = vpack.c.bf16 %v2081, %v2080
        %v2131 = vpack.c.bf16 %v2083, %v2082
        %v2132 = vpack.c.bf16 %v2085, %v2084
        %v2133 = vpack.c.bf16 %v2087, %v2086
        %v2134 = vpack.c.bf16 %v2089, %v2088
        %v2135 = vpack.c.bf16 %v2091, %v2090
        %v2136 = vpack.c.bf16 %v2093, %v2092
        %v2137 = vpack.c.bf16 %v2095, %v2094
        %v2138 = vpack.c.bf16 %v2097, %v2096
        %v2139 = vpack.c.bf16 %v2099, %v2098
        %v2140 = vpack.c.bf16 %v2101, %v2100
        %v2141 = vpack.c.bf16 %v2103, %v2102
        %v2142 = vpack.c.bf16 %v2105, %v2104
        %v2143 = vpack.c.bf16 %v2107, %v2106
        %v2144 = vpack.c.bf16 %v2109, %v2108
        %v2145 = vpack.c.bf16 %v2111, %v2110
        %v2146 = vpack.c.bf16 %v2113, %v2112
        %v2147 = vpack.c.bf16 %v2115, %v2114
        %v2180 = vunpack.c.l.b16 %v2116
        %v2181 = vunpack.c.h.b16 %v2116
        %v2182 = vunpack.c.l.b16 %v2117
        %v2183 = vunpack.c.h.b16 %v2117
        %v2184 = vunpack.c.l.b16 %v2118
        %v2185 = vunpack.c.h.b16 %v2118
        %v2186 = vunpack.c.l.b16 %v2119
        %v2187 = vunpack.c.h.b16 %v2119
        %v2188 = vunpack.c.l.b16 %v2120
        %v2189 = vunpack.c.h.b16 %v2120
        %v2190 = vunpack.c.l.b16 %v2121
        %v2191 = vunpack.c.h.b16 %v2121
        %v2192 = vunpack.c.l.b16 %v2122
        %v2193 = vunpack.c.h.b16 %v2122
        %v2194 = vunpack.c.l.b16 %v2123
        %v2195 = vunpack.c.h.b16 %v2123
        %v2196 = vunpack.c.l.b16 %v2124
        %v2197 = vunpack.c.h.b16 %v2124
        %v2198 = vunpack.c.l.b16 %v2125
        %v2199 = vunpack.c.h.b16 %v2125
        %v2200 = vunpack.c.l.b16 %v2126
        %v2201 = vunpack.c.h.b16 %v2126
        %v2202 = vunpack.c.l.b16 %v2127
        %v2203 = vunpack.c.h.b16 %v2127
        %v2204 = vunpack.c.l.b16 %v2128
        %v2205 = vunpack.c.h.b16 %v2128
        %v2206 = vunpack.c.l.b16 %v2129
        %v2207 = vunpack.c.h.b16 %v2129
        %v2208 = vunpack.c.l.b16 %v2130
        %v2209 = vunpack.c.h.b16 %v2130
        %v2210 = vunpack.c.l.b16 %v2131
        %v2211 = vunpack.c.h.b16 %v2131
        %v2212 = vunpack.c.l.b16 %v2132
        %v2213 = vunpack.c.h.b16 %v2132
        %v2214 = vunpack.c.l.b16 %v2133
        %v2215 = vunpack.c.h.b16 %v2133
        %v2216 = vunpack.c.l.b16 %v2134
        %v2217 = vunpack.c.h.b16 %v2134
        %v2218 = vunpack.c.l.b16 %v2135
        %v2219 = vunpack.c.h.b16 %v2135
        %v2220 = vunpack.c.l.b16 %v2136
        %v2221 = vunpack.c.h.b16 %v2136
        %v2222 = vunpack.c.l.b16 %v2137
        %v2223 = vunpack.c.h.b16 %v2137
        %v2224 = vunpack.c.l.b16 %v2138
        %v2225 = vunpack.c.h.b16 %v2138
        %v2226 = vunpack.c.l.b16 %v2139
        %v2227 = vunpack.c.h.b16 %v2139
        %v2228 = vunpack.c.l.b16 %v2140
        %v2229 = vunpack.c.h.b16 %v2140
        %v2230 = vunpack.c.l.b16 %v2141
        %v2231 = vunpack.c.h.b16 %v2141
        %v2232 = vunpack.c.l.b16 %v2142
        %v2233 = vunpack.c.h.b16 %v2142
        %v2234 = vunpack.c.l.b16 %v2143
        %v2235 = vunpack.c.h.b16 %v2143
        %v2236 = vunpack.c.l.b16 %v2144
        %v2237 = vunpack.c.h.b16 %v2144
        %v2238 = vunpack.c.l.b16 %v2145
        %v2239 = vunpack.c.h.b16 %v2145
        %v2240 = vunpack.c.l.b16 %v2146
        %v2241 = vunpack.c.h.b16 %v2146
        %v2242 = vunpack.c.l.b16 %v2147
        %v2243 = vunpack.c.h.b16 %v2147
        %v2244 = vpack.c.b16 %v2180, %v2180
        %v2245 = vpack.c.b16 %v2181, %v2181
        %v2246 = vpack.c.b16 %v2182, %v2182
        %v2247 = vpack.c.b16 %v2183, %v2183
        %v2248 = vpack.c.b16 %v2184, %v2184
        %v2249 = vpack.c.b16 %v2185, %v2185
        %v2250 = vpack.c.b16 %v2186, %v2186
        %v2251 = vpack.c.b16 %v2187, %v2187
        %v2252 = vpack.c.b16 %v2188, %v2188
        %v2253 = vpack.c.b16 %v2189, %v2189
        %v2254 = vpack.c.b16 %v2190, %v2190
        %v2255 = vpack.c.b16 %v2191, %v2191
        %v2256 = vpack.c.b16 %v2192, %v2192
        %v2257 = vpack.c.b16 %v2193, %v2193
        %v2258 = vpack.c.b16 %v2194, %v2194
        %v2259 = vpack.c.b16 %v2195, %v2195
        %v2260 = vpack.c.b16 %v2196, %v2196
        %v2261 = vpack.c.b16 %v2197, %v2197
        %v2262 = vpack.c.b16 %v2198, %v2198
        %v2263 = vpack.c.b16 %v2199, %v2199
        %v2264 = vpack.c.b16 %v2200, %v2200
        %v2265 = vpack.c.b16 %v2201, %v2201
        %v2266 = vpack.c.b16 %v2202, %v2202
        %v2267 = vpack.c.b16 %v2203, %v2203
        %v2268 = vpack.c.b16 %v2204, %v2204
        %v2269 = vpack.c.b16 %v2205, %v2205
        %v2270 = vpack.c.b16 %v2206, %v2206
        %v2271 = vpack.c.b16 %v2207, %v2207
        %v2272 = vpack.c.b16 %v2208, %v2208
        %v2273 = vpack.c.b16 %v2209, %v2209
        %v2274 = vpack.c.b16 %v2210, %v2210
        %v2275 = vpack.c.b16 %v2211, %v2211
        %v2276 = vpack.c.b16 %v2212, %v2212
        %v2277 = vpack.c.b16 %v2213, %v2213
        %v2278 = vpack.c.b16 %v2214, %v2214
        %v2279 = vpack.c.b16 %v2215, %v2215
        %v2280 = vpack.c.b16 %v2216, %v2216
        %v2281 = vpack.c.b16 %v2217, %v2217
        %v2282 = vpack.c.b16 %v2218, %v2218
        %v2283 = vpack.c.b16 %v2219, %v2219
        %v2284 = vpack.c.b16 %v2220, %v2220
        %v2285 = vpack.c.b16 %v2221, %v2221
        %v2286 = vpack.c.b16 %v2222, %v2222
        %v2287 = vpack.c.b16 %v2223, %v2223
        %v2288 = vpack.c.b16 %v2224, %v2224
        %v2289 = vpack.c.b16 %v2225, %v2225
        %v2290 = vpack.c.b16 %v2226, %v2226
        %v2291 = vpack.c.b16 %v2227, %v2227
        %v2292 = vpack.c.b16 %v2228, %v2228
        %v2293 = vpack.c.b16 %v2229, %v2229
        %v2294 = vpack.c.b16 %v2230, %v2230
        %v2295 = vpack.c.b16 %v2231, %v2231
        %v2296 = vpack.c.b16 %v2232, %v2232
        %v2297 = vpack.c.b16 %v2233, %v2233
        %v2298 = vpack.c.b16 %v2234, %v2234
        %v2299 = vpack.c.b16 %v2235, %v2235
        %v2300 = vpack.c.b16 %v2236, %v2236
        %v2301 = vpack.c.b16 %v2237, %v2237
        %v2302 = vpack.c.b16 %v2238, %v2238
        %v2303 = vpack.c.b16 %v2239, %v2239
        %v2304 = vpack.c.b16 %v2240, %v2240
        %v2305 = vpack.c.b16 %v2241, %v2241
        %v2306 = vpack.c.b16 %v2242, %v2242
        %v2307 = vpack.c.b16 %v2243, %v2243
        %vm2372 = vcmask 257024
        %2373 = vst.msk [vmem:[%s286] sm:$0xf] %vm2372, %v2244
        %2374 = vst.msk [vmem:[%s286 + $0x4] sm:$0xf] %vm2372, %v2245
        %2375 = vst.msk [vmem:[%s286 + $0x8] sm:$0xf] %vm2372, %v2246
        %2376 = vst.msk [vmem:[%s286 + $0xc] sm:$0xf] %vm2372, %v2247
        %2377 = vst.msk [vmem:[%s286 + $0x10] sm:$0xf] %vm2372, %v2248
        %2378 = vst.msk [vmem:[%s286 + $0x14] sm:$0xf] %vm2372, %v2249
        %2379 = vst.msk [vmem:[%s286 + $0x18] sm:$0xf] %vm2372, %v2250
        %2380 = vst.msk [vmem:[%s286 + $0x1c] sm:$0xf] %vm2372, %v2251
        %2381 = vst.msk [vmem:[%s286 + $0x20] sm:$0xf] %vm2372, %v2252
        %2382 = vst.msk [vmem:[%s286 + $0x24] sm:$0xf] %vm2372, %v2253
        %2383 = vst.msk [vmem:[%s286 + $0x28] sm:$0xf] %vm2372, %v2254
        %2384 = vst.msk [vmem:[%s286 + $0x2c] sm:$0xf] %vm2372, %v2255
        %2385 = vst.msk [vmem:[%s286 + $0x30] sm:$0xf] %vm2372, %v2256
        %2386 = vst.msk [vmem:[%s286 + $0x34] sm:$0xf] %vm2372, %v2257
        %2387 = vst.msk [vmem:[%s286 + $0x38] sm:$0xf] %vm2372, %v2258
        %2388 = vst.msk [vmem:[%s286 + $0x3c] sm:$0xf] %vm2372, %v2259
        %2389 = vst.msk [vmem:[%s286 + $0x40] sm:$0xf] %vm2372, %v2260
        %2390 = vst.msk [vmem:[%s286 + $0x44] sm:$0xf] %vm2372, %v2261
        %2391 = vst.msk [vmem:[%s286 + $0x48] sm:$0xf] %vm2372, %v2262
        %2392 = vst.msk [vmem:[%s286 + $0x4c] sm:$0xf] %vm2372, %v2263
        %2393 = vst.msk [vmem:[%s286 + $0x50] sm:$0xf] %vm2372, %v2264
        %2394 = vst.msk [vmem:[%s286 + $0x54] sm:$0xf] %vm2372, %v2265
        %2395 = vst.msk [vmem:[%s286 + $0x58] sm:$0xf] %vm2372, %v2266
        %2396 = vst.msk [vmem:[%s286 + $0x5c] sm:$0xf] %vm2372, %v2267
        %2397 = vst.msk [vmem:[%s286 + $0x60] sm:$0xf] %vm2372, %v2268
        %2398 = vst.msk [vmem:[%s286 + $0x64] sm:$0xf] %vm2372, %v2269
        %2399 = vst.msk [vmem:[%s286 + $0x68] sm:$0xf] %vm2372, %v2270
        %2400 = vst.msk [vmem:[%s286 + $0x6c] sm:$0xf] %vm2372, %v2271
        %2401 = vst.msk [vmem:[%s286 + $0x70] sm:$0xf] %vm2372, %v2272
        %2402 = vst.msk [vmem:[%s286 + $0x74] sm:$0xf] %vm2372, %v2273
        %2403 = vst.msk [vmem:[%s286 + $0x78] sm:$0xf] %vm2372, %v2274
        %2404 = vst.msk [vmem:[%s286 + $0x7c] sm:$0xf] %vm2372, %v2275
        %2405 = vst.msk [vmem:[%s286 + $0x80] sm:$0xf] %vm2372, %v2276
        %2406 = vst.msk [vmem:[%s286 + $0x84] sm:$0xf] %vm2372, %v2277
        %2407 = vst.msk [vmem:[%s286 + $0x88] sm:$0xf] %vm2372, %v2278
        %2408 = vst.msk [vmem:[%s286 + $0x8c] sm:$0xf] %vm2372, %v2279
        %2409 = vst.msk [vmem:[%s286 + $0x90] sm:$0xf] %vm2372, %v2280
        %2410 = vst.msk [vmem:[%s286 + $0x94] sm:$0xf] %vm2372, %v2281
        %2411 = vst.msk [vmem:[%s286 + $0x98] sm:$0xf] %vm2372, %v2282
        %2412 = vst.msk [vmem:[%s286 + $0x9c] sm:$0xf] %vm2372, %v2283
        %2413 = vst.msk [vmem:[%s286 + $0xa0] sm:$0xf] %vm2372, %v2284
        %2414 = vst.msk [vmem:[%s286 + $0xa4] sm:$0xf] %vm2372, %v2285
        %2415 = vst.msk [vmem:[%s286 + $0xa8] sm:$0xf] %vm2372, %v2286
        %2416 = vst.msk [vmem:[%s286 + $0xac] sm:$0xf] %vm2372, %v2287
        %2417 = vst.msk [vmem:[%s286 + $0xb0] sm:$0xf] %vm2372, %v2288
        %2418 = vst.msk [vmem:[%s286 + $0xb4] sm:$0xf] %vm2372, %v2289
        %2419 = vst.msk [vmem:[%s286 + $0xb8] sm:$0xf] %vm2372, %v2290
        %2420 = vst.msk [vmem:[%s286 + $0xbc] sm:$0xf] %vm2372, %v2291
        %2421 = vst.msk [vmem:[%s286 + $0xc0] sm:$0xf] %vm2372, %v2292
        %2422 = vst.msk [vmem:[%s286 + $0xc4] sm:$0xf] %vm2372, %v2293
        %2423 = vst.msk [vmem:[%s286 + $0xc8] sm:$0xf] %vm2372, %v2294
        %2424 = vst.msk [vmem:[%s286 + $0xcc] sm:$0xf] %vm2372, %v2295
        %2425 = vst.msk [vmem:[%s286 + $0xd0] sm:$0xf] %vm2372, %v2296
        %2426 = vst.msk [vmem:[%s286 + $0xd4] sm:$0xf] %vm2372, %v2297
        %2427 = vst.msk [vmem:[%s286 + $0xd8] sm:$0xf] %vm2372, %v2298
        %2428 = vst.msk [vmem:[%s286 + $0xdc] sm:$0xf] %vm2372, %v2299
        %2429 = vst.msk [vmem:[%s286 + $0xe0] sm:$0xf] %vm2372, %v2300
        %2430 = vst.msk [vmem:[%s286 + $0xe4] sm:$0xf] %vm2372, %v2301
        %2431 = vst.msk [vmem:[%s286 + $0xe8] sm:$0xf] %vm2372, %v2302
        %2432 = vst.msk [vmem:[%s286 + $0xec] sm:$0xf] %vm2372, %v2303
        %2433 = vst.msk [vmem:[%s286 + $0xf0] sm:$0xf] %vm2372, %v2304
        %2434 = vst.msk [vmem:[%s286 + $0xf4] sm:$0xf] %vm2372, %v2305
        %2435 = vst.msk [vmem:[%s286 + $0xf8] sm:$0xf] %vm2372, %v2306
        %2436 = vst.msk [vmem:[%s286 + $0xfc] sm:$0xf] %vm2372, %v2307
        %s2437 = sand.u32 %s168, 1
        %s2438 = sand.u32 %s168, 1
        %s2439 = smul.addr %s2438, 256
        %s2440 = scalar_lea.vmem [#allocation2], %s2439
        // Predicated region
        $region41: #{tpu_custom_call.1} parent=39 // pred_check
          %p2441 = pneg %p178
        $region42: #{tpu_custom_call.1} parent=39 // pred_check_branch
          %2443 = sbr.rel (%p2441) target = $region44
        $region43: #{tpu_custom_call.1} parent=39 // pred_region
          %s2444 = smul.u32 64, %s21
          %s2445 = ssub.s32 160, %s2444
          %p2446 = scmp.lt.s32.totalorder %s2445, 64
          %s2447 = scalar_select %p2446, %s2445, 64
          %s2448 = smul.u32 64, %s2447
          %p2449 = scmp.ne.s32.totalorder 0, %s2448
          %s2450 = sadd.s32 %s20, %s2444
          %s2451 = smul.addr %s2450, 4
          %s2452 = scalar_lea.vmem %s5, %s2451
          // Predicated region
          $region45: #{tpu_custom_call.1} parent=43 // pred_check
            %p2453 = pneg %p2449
          $region46: #{tpu_custom_call.1} parent=43 // pred_check_branch
            %2455 = sbr.rel (%p2453) target = $region48
          $region47: #{tpu_custom_call.1} parent=43 // pred_region
            // Predicated region
            $region49: #{tpu_custom_call.1} parent=47 // pred_check
              _
            $region50: #{tpu_custom_call.1} parent=47 // pred_check_branch
              %2457 = sbr.rel target = $region52
            $region51: #{tpu_custom_call.1} parent=47 // pred_region
              // Predicated region
              $region71: #{tpu_custom_call.1} parent=51 // pred_check
                _
              $region72: #{tpu_custom_call.1} parent=51 // pred_check_branch
                %2632 = sbr.rel (0) target = $region74
              $region73: #{tpu_custom_call.1} parent=51 // pred_region
                %s2634 = sshrl.u32 %s2447, 6
                // While loop
                $region75: #{tpu_custom_call.1} parent=73 // loop_pre_header
                  _
                $region76: #{tpu_custom_call.1} parent=73 // loop_header
                  %s2636 = sphi 0, %s2638
                  %p2637 = scmp.ge.s32.totalorder %s2636, %s2634
                  %s2641 = sphi 0, %s2774
                  %s2642 = sphi %s2440, %s2777
                  %s2643 = sphi %s2452, %s2778
                $region77: #{tpu_custom_call.1} parent=73 // loop_header_branch
                  %2640 = sbr.rel (%p2637) target = $region81
                $region78: #{tpu_custom_call.1} parent=73 // loop_body
                  %v2644 = vld [vmem:[%s2642] sm:$0xf]
                  %2645 = vst [vmem:[%s2643] sm:$0xf] %v2644
                  %v2646 = vld [vmem:[%s2642 + $0x4] sm:$0xf]
                  %2647 = vst [vmem:[%s2643 + $0x4] sm:$0xf] %v2646
                  %v2648 = vld [vmem:[%s2642 + $0x8] sm:$0xf]
                  %2649 = vst [vmem:[%s2643 + $0x8] sm:$0xf] %v2648
                  %v2650 = vld [vmem:[%s2642 + $0xc] sm:$0xf]
                  %2651 = vst [vmem:[%s2643 + $0xc] sm:$0xf] %v2650
                  %v2652 = vld [vmem:[%s2642 + $0x10] sm:$0xf]
                  %2653 = vst [vmem:[%s2643 + $0x10] sm:$0xf] %v2652
                  %v2654 = vld [vmem:[%s2642 + $0x14] sm:$0xf]
                  %2655 = vst [vmem:[%s2643 + $0x14] sm:$0xf] %v2654
                  %v2656 = vld [vmem:[%s2642 + $0x18] sm:$0xf]
                  %2657 = vst [vmem:[%s2643 + $0x18] sm:$0xf] %v2656
                  %v2658 = vld [vmem:[%s2642 + $0x1c] sm:$0xf]
                  %2659 = vst [vmem:[%s2643 + $0x1c] sm:$0xf] %v2658
                  %v2660 = vld [vmem:[%s2642 + $0x20] sm:$0xf]
                  %2661 = vst [vmem:[%s2643 + $0x20] sm:$0xf] %v2660
                  %v2662 = vld [vmem:[%s2642 + $0x24] sm:$0xf]
                  %2663 = vst [vmem:[%s2643 + $0x24] sm:$0xf] %v2662
                  %v2664 = vld [vmem:[%s2642 + $0x28] sm:$0xf]
                  %2665 = vst [vmem:[%s2643 + $0x28] sm:$0xf] %v2664
                  %v2666 = vld [vmem:[%s2642 + $0x2c] sm:$0xf]
                  %2667 = vst [vmem:[%s2643 + $0x2c] sm:$0xf] %v2666
                  %v2668 = vld [vmem:[%s2642 + $0x30] sm:$0xf]
                  %2669 = vst [vmem:[%s2643 + $0x30] sm:$0xf] %v2668
                  %v2670 = vld [vmem:[%s2642 + $0x34] sm:$0xf]
                  %2671 = vst [vmem:[%s2643 + $0x34] sm:$0xf] %v2670
                  %v2672 = vld [vmem:[%s2642 + $0x38] sm:$0xf]
                  %2673 = vst [vmem:[%s2643 + $0x38] sm:$0xf] %v2672
                  %v2674 = vld [vmem:[%s2642 + $0x3c] sm:$0xf]
                  %2675 = vst [vmem:[%s2643 + $0x3c] sm:$0xf] %v2674
                  %v2676 = vld [vmem:[%s2642 + $0x40] sm:$0xf]
                  %2677 = vst [vmem:[%s2643 + $0x40] sm:$0xf] %v2676
                  %v2678 = vld [vmem:[%s2642 + $0x44] sm:$0xf]
                  %2679 = vst [vmem:[%s2643 + $0x44] sm:$0xf] %v2678
                  %v2680 = vld [vmem:[%s2642 + $0x48] sm:$0xf]
                  %2681 = vst [vmem:[%s2643 + $0x48] sm:$0xf] %v2680
                  %v2682 = vld [vmem:[%s2642 + $0x4c] sm:$0xf]
                  %2683 = vst [vmem:[%s2643 + $0x4c] sm:$0xf] %v2682
                  %v2684 = vld [vmem:[%s2642 + $0x50] sm:$0xf]
                  %2685 = vst [vmem:[%s2643 + $0x50] sm:$0xf] %v2684
                  %v2686 = vld [vmem:[%s2642 + $0x54] sm:$0xf]
                  %2687 = vst [vmem:[%s2643 + $0x54] sm:$0xf] %v2686
                  %v2688 = vld [vmem:[%s2642 + $0x58] sm:$0xf]
                  %2689 = vst [vmem:[%s2643 + $0x58] sm:$0xf] %v2688
                  %v2690 = vld [vmem:[%s2642 + $0x5c] sm:$0xf]
                  %2691 = vst [vmem:[%s2643 + $0x5c] sm:$0xf] %v2690
                  %v2692 = vld [vmem:[%s2642 + $0x60] sm:$0xf]
                  %2693 = vst [vmem:[%s2643 + $0x60] sm:$0xf] %v2692
                  %v2694 = vld [vmem:[%s2642 + $0x64] sm:$0xf]
                  %2695 = vst [vmem:[%s2643 + $0x64] sm:$0xf] %v2694
                  %v2696 = vld [vmem:[%s2642 + $0x68] sm:$0xf]
                  %2697 = vst [vmem:[%s2643 + $0x68] sm:$0xf] %v2696
                  %v2698 = vld [vmem:[%s2642 + $0x6c] sm:$0xf]
                  %2699 = vst [vmem:[%s2643 + $0x6c] sm:$0xf] %v2698
                  %v2700 = vld [vmem:[%s2642 + $0x70] sm:$0xf]
                  %2701 = vst [vmem:[%s2643 + $0x70] sm:$0xf] %v2700
                  %v2702 = vld [vmem:[%s2642 + $0x74] sm:$0xf]
                  %2703 = vst [vmem:[%s2643 + $0x74] sm:$0xf] %v2702
                  %v2704 = vld [vmem:[%s2642 + $0x78] sm:$0xf]
                  %2705 = vst [vmem:[%s2643 + $0x78] sm:$0xf] %v2704
                  %v2706 = vld [vmem:[%s2642 + $0x7c] sm:$0xf]
                  %2707 = vst [vmem:[%s2643 + $0x7c] sm:$0xf] %v2706
                  %v2708 = vld [vmem:[%s2642 + $0x80] sm:$0xf]
                  %2709 = vst [vmem:[%s2643 + $0x80] sm:$0xf] %v2708
                  %v2710 = vld [vmem:[%s2642 + $0x84] sm:$0xf]
                  %2711 = vst [vmem:[%s2643 + $0x84] sm:$0xf] %v2710
                  %v2712 = vld [vmem:[%s2642 + $0x88] sm:$0xf]
                  %2713 = vst [vmem:[%s2643 + $0x88] sm:$0xf] %v2712
                  %v2714 = vld [vmem:[%s2642 + $0x8c] sm:$0xf]
                  %2715 = vst [vmem:[%s2643 + $0x8c] sm:$0xf] %v2714
                  %v2716 = vld [vmem:[%s2642 + $0x90] sm:$0xf]
                  %2717 = vst [vmem:[%s2643 + $0x90] sm:$0xf] %v2716
                  %v2718 = vld [vmem:[%s2642 + $0x94] sm:$0xf]
                  %2719 = vst [vmem:[%s2643 + $0x94] sm:$0xf] %v2718
                  %v2720 = vld [vmem:[%s2642 + $0x98] sm:$0xf]
                  %2721 = vst [vmem:[%s2643 + $0x98] sm:$0xf] %v2720
                  %v2722 = vld [vmem:[%s2642 + $0x9c] sm:$0xf]
                  %2723 = vst [vmem:[%s2643 + $0x9c] sm:$0xf] %v2722
                  %v2724 = vld [vmem:[%s2642 + $0xa0] sm:$0xf]
                  %2725 = vst [vmem:[%s2643 + $0xa0] sm:$0xf] %v2724
                  %v2726 = vld [vmem:[%s2642 + $0xa4] sm:$0xf]
                  %2727 = vst [vmem:[%s2643 + $0xa4] sm:$0xf] %v2726
                  %v2728 = vld [vmem:[%s2642 + $0xa8] sm:$0xf]
                  %2729 = vst [vmem:[%s2643 + $0xa8] sm:$0xf] %v2728
                  %v2730 = vld [vmem:[%s2642 + $0xac] sm:$0xf]
                  %2731 = vst [vmem:[%s2643 + $0xac] sm:$0xf] %v2730
                  %v2732 = vld [vmem:[%s2642 + $0xb0] sm:$0xf]
                  %2733 = vst [vmem:[%s2643 + $0xb0] sm:$0xf] %v2732
                  %v2734 = vld [vmem:[%s2642 + $0xb4] sm:$0xf]
                  %2735 = vst [vmem:[%s2643 + $0xb4] sm:$0xf] %v2734
                  %v2736 = vld [vmem:[%s2642 + $0xb8] sm:$0xf]
                  %2737 = vst [vmem:[%s2643 + $0xb8] sm:$0xf] %v2736
                  %v2738 = vld [vmem:[%s2642 + $0xbc] sm:$0xf]
                  %2739 = vst [vmem:[%s2643 + $0xbc] sm:$0xf] %v2738
                  %v2740 = vld [vmem:[%s2642 + $0xc0] sm:$0xf]
                  %2741 = vst [vmem:[%s2643 + $0xc0] sm:$0xf] %v2740
                  %v2742 = vld [vmem:[%s2642 + $0xc4] sm:$0xf]
                  %2743 = vst [vmem:[%s2643 + $0xc4] sm:$0xf] %v2742
                  %v2744 = vld [vmem:[%s2642 + $0xc8] sm:$0xf]
                  %2745 = vst [vmem:[%s2643 + $0xc8] sm:$0xf] %v2744
                  %v2746 = vld [vmem:[%s2642 + $0xcc] sm:$0xf]
                  %2747 = vst [vmem:[%s2643 + $0xcc] sm:$0xf] %v2746
                  %v2748 = vld [vmem:[%s2642 + $0xd0] sm:$0xf]
                  %2749 = vst [vmem:[%s2643 + $0xd0] sm:$0xf] %v2748
                  %v2750 = vld [vmem:[%s2642 + $0xd4] sm:$0xf]
                  %2751 = vst [vmem:[%s2643 + $0xd4] sm:$0xf] %v2750
                  %v2752 = vld [vmem:[%s2642 + $0xd8] sm:$0xf]
                  %2753 = vst [vmem:[%s2643 + $0xd8] sm:$0xf] %v2752
                  %v2754 = vld [vmem:[%s2642 + $0xdc] sm:$0xf]
                  %2755 = vst [vmem:[%s2643 + $0xdc] sm:$0xf] %v2754
                  %v2756 = vld [vmem:[%s2642 + $0xe0] sm:$0xf]
                  %2757 = vst [vmem:[%s2643 + $0xe0] sm:$0xf] %v2756
                  %v2758 = vld [vmem:[%s2642 + $0xe4] sm:$0xf]
                  %2759 = vst [vmem:[%s2643 + $0xe4] sm:$0xf] %v2758
                  %v2760 = vld [vmem:[%s2642 + $0xe8] sm:$0xf]
                  %2761 = vst [vmem:[%s2643 + $0xe8] sm:$0xf] %v2760
                  %v2762 = vld [vmem:[%s2642 + $0xec] sm:$0xf]
                  %2763 = vst [vmem:[%s2643 + $0xec] sm:$0xf] %v2762
                  %v2764 = vld [vmem:[%s2642 + $0xf0] sm:$0xf]
                  %2765 = vst [vmem:[%s2643 + $0xf0] sm:$0xf] %v2764
                  %v2766 = vld [vmem:[%s2642 + $0xf4] sm:$0xf]
                  %2767 = vst [vmem:[%s2643 + $0xf4] sm:$0xf] %v2766
                  %v2768 = vld [vmem:[%s2642 + $0xf8] sm:$0xf]
                  %2769 = vst [vmem:[%s2643 + $0xf8] sm:$0xf] %v2768
                  %v2770 = vld [vmem:[%s2642 + $0xfc] sm:$0xf]
                  %2771 = vst [vmem:[%s2643 + $0xfc] sm:$0xf] %v2770
                  %s2772 = sadd.s32 1, %s2641
                  %p2773 = scmp.ge.s32.totalorder %s2772, %s2634
                  %s2774 = scalar_select %p2773, 0, %s2772
                  %s2775 = smul.u32 %s2774, 256
                  %s2776 = smul.u32 %s2774, 256
                  %s2777 = scalar_lea.vmem %s2440, %s2775 [#allocation2]
                  %s2778 = scalar_lea.vmem %s2452, %s2776
                $region79: #{tpu_custom_call.1} parent=73 // loop_footer
                  %s2638 = sadd.s32 %s2636, 1
                $region80: #{tpu_custom_call.1} parent=73 // loop_footer_branch
                  %2635 = sbr.rel target = $region76
                $region81: #{tpu_custom_call.1} parent=73 // loop_exit
                  _
                %s2779 = sshrl.u32 %s2447, 6
                %s2780 = sand.u32 %s2447, 63
                %s2781 = smul.u32 %s2779, 64
                %s2782 = smul.u32 4, %s2781
                %s2783 = scalar_lea.vmem %s2440, %s2782 [#allocation2]
                %s2784 = smul.u32 4, %s2781
                %s2785 = scalar_lea.vmem %s2452, %s2784
                // While loop
                $region82: #{tpu_custom_call.1} parent=73 // loop_pre_header
                  _
                $region83: #{tpu_custom_call.1} parent=73 // loop_header
                  %s2787 = sphi 0, %s2789
                  %p2788 = scmp.ge.s32.totalorder %s2787, %s2780
                  %s2792 = sphi 0, %s2799
                  %s2793 = sphi %s2783, %s2802
                  %s2794 = sphi %s2785, %s2803
                $region84: #{tpu_custom_call.1} parent=73 // loop_header_branch
                  %2791 = sbr.rel (%p2788) target = $region88
                $region85: #{tpu_custom_call.1} parent=73 // loop_body
                  %v2795 = vld [vmem:[%s2793] sm:$0xf]
                  %2796 = vst [vmem:[%s2794] sm:$0xf] %v2795
                  %s2797 = sadd.s32 1, %s2792
                  %p2798 = scmp.ge.s32.totalorder %s2797, %s2780
                  %s2799 = scalar_select %p2798, 0, %s2797
                  %s2800 = smul.u32 %s2799, 4
                  %s2801 = smul.u32 %s2799, 4
                  %s2802 = scalar_lea.vmem %s2783, %s2800 [#allocation2]
                  %s2803 = scalar_lea.vmem %s2785, %s2801
                $region86: #{tpu_custom_call.1} parent=73 // loop_footer
                  %s2789 = sadd.s32 %s2787, 1
                $region87: #{tpu_custom_call.1} parent=73 // loop_footer_branch
                  %2786 = sbr.rel target = $region83
                $region88: #{tpu_custom_call.1} parent=73 // loop_exit
                  _
              $region74: #{tpu_custom_call.1} parent=51 // pred_fallthru
                _
            $region52: #{tpu_custom_call.1} parent=47 // pred_fallthru
              _
            // Predicated region
            $region53: #{tpu_custom_call.1} parent=47 // pred_check
              _
            $region54: #{tpu_custom_call.1} parent=47 // pred_check_branch
              %2459 = sbr.rel (0) target = $region56
            $region55: #{tpu_custom_call.1} parent=47 // pred_region
              %s2461 = sshrl.u32 %s2447, 6
              // While loop
              $region57: #{tpu_custom_call.1} parent=55 // loop_pre_header
                _
              $region58: #{tpu_custom_call.1} parent=55 // loop_header
                %s2463 = sphi 0, %s2465
                %p2464 = scmp.ge.s32.totalorder %s2463, %s2461
                %s2468 = sphi 0, %s2601
                %s2469 = sphi %s2440, %s2604
                %s2470 = sphi %s2452, %s2605
              $region59: #{tpu_custom_call.1} parent=55 // loop_header_branch
                %2467 = sbr.rel (%p2464) target = $region63
              $region60: #{tpu_custom_call.1} parent=55 // loop_body
                %v2471 = vld [vmem:[%s2469] sm:$0xf]
                %2472 = vst [vmem:[%s2470] sm:$0xf] %v2471
                %v2473 = vld [vmem:[%s2469 + $0x4] sm:$0xf]
                %2474 = vst [vmem:[%s2470 + $0x4] sm:$0xf] %v2473
                %v2475 = vld [vmem:[%s2469 + $0x8] sm:$0xf]
                %2476 = vst [vmem:[%s2470 + $0x8] sm:$0xf] %v2475
                %v2477 = vld [vmem:[%s2469 + $0xc] sm:$0xf]
                %2478 = vst [vmem:[%s2470 + $0xc] sm:$0xf] %v2477
                %v2479 = vld [vmem:[%s2469 + $0x10] sm:$0xf]
                %2480 = vst [vmem:[%s2470 + $0x10] sm:$0xf] %v2479
                %v2481 = vld [vmem:[%s2469 + $0x14] sm:$0xf]
                %2482 = vst [vmem:[%s2470 + $0x14] sm:$0xf] %v2481
                %v2483 = vld [vmem:[%s2469 + $0x18] sm:$0xf]
                %2484 = vst [vmem:[%s2470 + $0x18] sm:$0xf] %v2483
                %v2485 = vld [vmem:[%s2469 + $0x1c] sm:$0xf]
                %2486 = vst [vmem:[%s2470 + $0x1c] sm:$0xf] %v2485
                %v2487 = vld [vmem:[%s2469 + $0x20] sm:$0xf]
                %2488 = vst [vmem:[%s2470 + $0x20] sm:$0xf] %v2487
                %v2489 = vld [vmem:[%s2469 + $0x24] sm:$0xf]
                %2490 = vst [vmem:[%s2470 + $0x24] sm:$0xf] %v2489
                %v2491 = vld [vmem:[%s2469 + $0x28] sm:$0xf]
                %2492 = vst [vmem:[%s2470 + $0x28] sm:$0xf] %v2491
                %v2493 = vld [vmem:[%s2469 + $0x2c] sm:$0xf]
                %2494 = vst [vmem:[%s2470 + $0x2c] sm:$0xf] %v2493
                %v2495 = vld [vmem:[%s2469 + $0x30] sm:$0xf]
                %2496 = vst [vmem:[%s2470 + $0x30] sm:$0xf] %v2495
                %v2497 = vld [vmem:[%s2469 + $0x34] sm:$0xf]
                %2498 = vst [vmem:[%s2470 + $0x34] sm:$0xf] %v2497
                %v2499 = vld [vmem:[%s2469 + $0x38] sm:$0xf]
                %2500 = vst [vmem:[%s2470 + $0x38] sm:$0xf] %v2499
                %v2501 = vld [vmem:[%s2469 + $0x3c] sm:$0xf]
                %2502 = vst [vmem:[%s2470 + $0x3c] sm:$0xf] %v2501
                %v2503 = vld [vmem:[%s2469 + $0x40] sm:$0xf]
                %2504 = vst [vmem:[%s2470 + $0x40] sm:$0xf] %v2503
                %v2505 = vld [vmem:[%s2469 + $0x44] sm:$0xf]
                %2506 = vst [vmem:[%s2470 + $0x44] sm:$0xf] %v2505
                %v2507 = vld [vmem:[%s2469 + $0x48] sm:$0xf]
                %2508 = vst [vmem:[%s2470 + $0x48] sm:$0xf] %v2507
                %v2509 = vld [vmem:[%s2469 + $0x4c] sm:$0xf]
                %2510 = vst [vmem:[%s2470 + $0x4c] sm:$0xf] %v2509
                %v2511 = vld [vmem:[%s2469 + $0x50] sm:$0xf]
                %2512 = vst [vmem:[%s2470 + $0x50] sm:$0xf] %v2511
                %v2513 = vld [vmem:[%s2469 + $0x54] sm:$0xf]
                %2514 = vst [vmem:[%s2470 + $0x54] sm:$0xf] %v2513
                %v2515 = vld [vmem:[%s2469 + $0x58] sm:$0xf]
                %2516 = vst [vmem:[%s2470 + $0x58] sm:$0xf] %v2515
                %v2517 = vld [vmem:[%s2469 + $0x5c] sm:$0xf]
                %2518 = vst [vmem:[%s2470 + $0x5c] sm:$0xf] %v2517
                %v2519 = vld [vmem:[%s2469 + $0x60] sm:$0xf]
                %2520 = vst [vmem:[%s2470 + $0x60] sm:$0xf] %v2519
                %v2521 = vld [vmem:[%s2469 + $0x64] sm:$0xf]
                %2522 = vst [vmem:[%s2470 + $0x64] sm:$0xf] %v2521
                %v2523 = vld [vmem:[%s2469 + $0x68] sm:$0xf]
                %2524 = vst [vmem:[%s2470 + $0x68] sm:$0xf] %v2523
                %v2525 = vld [vmem:[%s2469 + $0x6c] sm:$0xf]
                %2526 = vst [vmem:[%s2470 + $0x6c] sm:$0xf] %v2525
                %v2527 = vld [vmem:[%s2469 + $0x70] sm:$0xf]
                %2528 = vst [vmem:[%s2470 + $0x70] sm:$0xf] %v2527
                %v2529 = vld [vmem:[%s2469 + $0x74] sm:$0xf]
                %2530 = vst [vmem:[%s2470 + $0x74] sm:$0xf] %v2529
                %v2531 = vld [vmem:[%s2469 + $0x78] sm:$0xf]
                %2532 = vst [vmem:[%s2470 + $0x78] sm:$0xf] %v2531
                %v2533 = vld [vmem:[%s2469 + $0x7c] sm:$0xf]
                %2534 = vst [vmem:[%s2470 + $0x7c] sm:$0xf] %v2533
                %v2535 = vld [vmem:[%s2469 + $0x80] sm:$0xf]
                %2536 = vst [vmem:[%s2470 + $0x80] sm:$0xf] %v2535
                %v2537 = vld [vmem:[%s2469 + $0x84] sm:$0xf]
                %2538 = vst [vmem:[%s2470 + $0x84] sm:$0xf] %v2537
                %v2539 = vld [vmem:[%s2469 + $0x88] sm:$0xf]
                %2540 = vst [vmem:[%s2470 + $0x88] sm:$0xf] %v2539
                %v2541 = vld [vmem:[%s2469 + $0x8c] sm:$0xf]
                %2542 = vst [vmem:[%s2470 + $0x8c] sm:$0xf] %v2541
                %v2543 = vld [vmem:[%s2469 + $0x90] sm:$0xf]
                %2544 = vst [vmem:[%s2470 + $0x90] sm:$0xf] %v2543
                %v2545 = vld [vmem:[%s2469 + $0x94] sm:$0xf]
                %2546 = vst [vmem:[%s2470 + $0x94] sm:$0xf] %v2545
                %v2547 = vld [vmem:[%s2469 + $0x98] sm:$0xf]
                %2548 = vst [vmem:[%s2470 + $0x98] sm:$0xf] %v2547
                %v2549 = vld [vmem:[%s2469 + $0x9c] sm:$0xf]
                %2550 = vst [vmem:[%s2470 + $0x9c] sm:$0xf] %v2549
                %v2551 = vld [vmem:[%s2469 + $0xa0] sm:$0xf]
                %2552 = vst [vmem:[%s2470 + $0xa0] sm:$0xf] %v2551
                %v2553 = vld [vmem:[%s2469 + $0xa4] sm:$0xf]
                %2554 = vst [vmem:[%s2470 + $0xa4] sm:$0xf] %v2553
                %v2555 = vld [vmem:[%s2469 + $0xa8] sm:$0xf]
                %2556 = vst [vmem:[%s2470 + $0xa8] sm:$0xf] %v2555
                %v2557 = vld [vmem:[%s2469 + $0xac] sm:$0xf]
                %2558 = vst [vmem:[%s2470 + $0xac] sm:$0xf] %v2557
                %v2559 = vld [vmem:[%s2469 + $0xb0] sm:$0xf]
                %2560 = vst [vmem:[%s2470 + $0xb0] sm:$0xf] %v2559
                %v2561 = vld [vmem:[%s2469 + $0xb4] sm:$0xf]
                %2562 = vst [vmem:[%s2470 + $0xb4] sm:$0xf] %v2561
                %v2563 = vld [vmem:[%s2469 + $0xb8] sm:$0xf]
                %2564 = vst [vmem:[%s2470 + $0xb8] sm:$0xf] %v2563
                %v2565 = vld [vmem:[%s2469 + $0xbc] sm:$0xf]
                %2566 = vst [vmem:[%s2470 + $0xbc] sm:$0xf] %v2565
                %v2567 = vld [vmem:[%s2469 + $0xc0] sm:$0xf]
                %2568 = vst [vmem:[%s2470 + $0xc0] sm:$0xf] %v2567
                %v2569 = vld [vmem:[%s2469 + $0xc4] sm:$0xf]
                %2570 = vst [vmem:[%s2470 + $0xc4] sm:$0xf] %v2569
                %v2571 = vld [vmem:[%s2469 + $0xc8] sm:$0xf]
                %2572 = vst [vmem:[%s2470 + $0xc8] sm:$0xf] %v2571
                %v2573 = vld [vmem:[%s2469 + $0xcc] sm:$0xf]
                %2574 = vst [vmem:[%s2470 + $0xcc] sm:$0xf] %v2573
                %v2575 = vld [vmem:[%s2469 + $0xd0] sm:$0xf]
                %2576 = vst [vmem:[%s2470 + $0xd0] sm:$0xf] %v2575
                %v2577 = vld [vmem:[%s2469 + $0xd4] sm:$0xf]
                %2578 = vst [vmem:[%s2470 + $0xd4] sm:$0xf] %v2577
                %v2579 = vld [vmem:[%s2469 + $0xd8] sm:$0xf]
                %2580 = vst [vmem:[%s2470 + $0xd8] sm:$0xf] %v2579
                %v2581 = vld [vmem:[%s2469 + $0xdc] sm:$0xf]
                %2582 = vst [vmem:[%s2470 + $0xdc] sm:$0xf] %v2581
                %v2583 = vld [vmem:[%s2469 + $0xe0] sm:$0xf]
                %2584 = vst [vmem:[%s2470 + $0xe0] sm:$0xf] %v2583
                %v2585 = vld [vmem:[%s2469 + $0xe4] sm:$0xf]
                %2586 = vst [vmem:[%s2470 + $0xe4] sm:$0xf] %v2585
                %v2587 = vld [vmem:[%s2469 + $0xe8] sm:$0xf]
                %2588 = vst [vmem:[%s2470 + $0xe8] sm:$0xf] %v2587
                %v2589 = vld [vmem:[%s2469 + $0xec] sm:$0xf]
                %2590 = vst [vmem:[%s2470 + $0xec] sm:$0xf] %v2589
                %v2591 = vld [vmem:[%s2469 + $0xf0] sm:$0xf]
                %2592 = vst [vmem:[%s2470 + $0xf0] sm:$0xf] %v2591
                %v2593 = vld [vmem:[%s2469 + $0xf4] sm:$0xf]
                %2594 = vst [vmem:[%s2470 + $0xf4] sm:$0xf] %v2593
                %v2595 = vld [vmem:[%s2469 + $0xf8] sm:$0xf]
                %2596 = vst [vmem:[%s2470 + $0xf8] sm:$0xf] %v2595
                %v2597 = vld [vmem:[%s2469 + $0xfc] sm:$0xf]
                %2598 = vst [vmem:[%s2470 + $0xfc] sm:$0xf] %v2597
                %s2599 = sadd.s32 1, %s2468
                %p2600 = scmp.ge.s32.totalorder %s2599, %s2461
                %s2601 = scalar_select %p2600, 0, %s2599
                %s2602 = smul.u32 %s2601, 256
                %s2603 = smul.u32 %s2601, 256
                %s2604 = scalar_lea.vmem %s2440, %s2602 [#allocation2]
                %s2605 = scalar_lea.vmem %s2452, %s2603
              $region61: #{tpu_custom_call.1} parent=55 // loop_footer
                %s2465 = sadd.s32 %s2463, 1
              $region62: #{tpu_custom_call.1} parent=55 // loop_footer_branch
                %2462 = sbr.rel target = $region58
              $region63: #{tpu_custom_call.1} parent=55 // loop_exit
                _
              %s2606 = sshrl.u32 %s2447, 6
              %s2607 = sand.u32 %s2447, 63
              %s2608 = smul.u32 %s2606, 64
              %s2609 = smul.u32 4, %s2608
              %s2610 = scalar_lea.vmem %s2440, %s2609 [#allocation2]
              %s2611 = smul.u32 4, %s2608
              %s2612 = scalar_lea.vmem %s2452, %s2611
              // While loop
              $region64: #{tpu_custom_call.1} parent=55 // loop_pre_header
                _
              $region65: #{tpu_custom_call.1} parent=55 // loop_header
                %s2614 = sphi 0, %s2616
                %p2615 = scmp.ge.s32.totalorder %s2614, %s2607
                %s2619 = sphi 0, %s2626
                %s2620 = sphi %s2610, %s2629
                %s2621 = sphi %s2612, %s2630
              $region66: #{tpu_custom_call.1} parent=55 // loop_header_branch
                %2618 = sbr.rel (%p2615) target = $region70
              $region67: #{tpu_custom_call.1} parent=55 // loop_body
                %v2622 = vld [vmem:[%s2620] sm:$0xf]
                %2623 = vst [vmem:[%s2621] sm:$0xf] %v2622
                %s2624 = sadd.s32 1, %s2619
                %p2625 = scmp.ge.s32.totalorder %s2624, %s2607
                %s2626 = scalar_select %p2625, 0, %s2624
                %s2627 = smul.u32 %s2626, 4
                %s2628 = smul.u32 %s2626, 4
                %s2629 = scalar_lea.vmem %s2610, %s2627 [#allocation2]
                %s2630 = scalar_lea.vmem %s2612, %s2628
              $region68: #{tpu_custom_call.1} parent=55 // loop_footer
                %s2616 = sadd.s32 %s2614, 1
              $region69: #{tpu_custom_call.1} parent=55 // loop_footer_branch
                %2613 = sbr.rel target = $region65
              $region70: #{tpu_custom_call.1} parent=55 // loop_exit
                _
            $region56: #{tpu_custom_call.1} parent=47 // pred_fallthru
              _
          $region48: #{tpu_custom_call.1} parent=43 // pred_fallthru
            _
          %2804 = vnop
        $region44: #{tpu_custom_call.1} parent=39 // pred_fallthru
          _
      $region40: #{tpu_custom_call.1} parent=5 // pred_fallthru
        _
      %p2805 = scmp.le.s32.totalorder 2, %s11
      // Predicated region
      $region89: #{tpu_custom_call.1} parent=5 // pred_check
        %p2806 = pneg %p2805
      $region90: #{tpu_custom_call.1} parent=5 // pred_check_branch
        %2808 = sbr.rel (%p2806) target = $region92
      $region91: #{tpu_custom_call.1} parent=5 // pred_region
        %s2809 = ssub.s32 %s11, 2
        // Predicated region
        $region93: #{tpu_custom_call.1} parent=91 // pred_check
          %p2810 = pneg %p184
        $region94: #{tpu_custom_call.1} parent=91 // pred_check_branch
          %2812 = sbr.rel (%p2810) target = $region96
        $region95: #{tpu_custom_call.1} parent=91 // pred_region
          %s2813 = sand.u32 %s169, 1
          %s2814 = sand.u32 %s169, 1
          %s2815 = smul.addr %s2814, 256
          %s2816 = scalar_lea.vmem [#allocation2], %s2815
        $region96: #{tpu_custom_call.1} parent=91 // pred_fallthru
          _
      $region92: #{tpu_custom_call.1} parent=5 // pred_fallthru
        _
    $region6: #{tpu_custom_call.1} parent=1 // loop_footer
      %s15 = sadd.s32 1, %s11
    $region7: #{tpu_custom_call.1} parent=1 // loop_footer_branch
      %10 = sbr.rel target = $region3
    $region8: #{tpu_custom_call.1} parent=1 // loop_exit
      _

</llo_original>
